<compile_context>
chip_gen: v6e
topology: v6e:2x2x1
jax: 0.10.0
libtpu: 0.0.40
codegen_flags: <defaults>
</compile_context>

<pallas_src>
import functools

import jax
import jax.numpy as jnp
import numpy as np
from jax.experimental import pallas as pl
from jax.experimental.pallas import tpu as pltpu


# ----------------------------------------------------------------------------
# Fused kernel: 1x1 conv (matmul over channels) + bias + sigmoid + box decode.
#
# Grid: (batch, spatial_tile, anchor).  Block layout (spatial on sublanes):
#   x_ref   : (tn, C)   activations, bf16
#   w_ref   : (C, no)   per-anchor conv weight, bf16
#   b_ref   : (1, no)   per-anchor conv bias, f32
#   raw_ref : (tn, no)  raw conv output (pre-sigmoid), bf16
#   dec_ref : (tn, no)  decoded boxes / scores, f32
# ----------------------------------------------------------------------------
def _detect_kernel(x_ref, w_ref, b_ref, raw_ref, dec_ref, *, nx, stride, anchors, tn):
    conv = jnp.dot(x_ref[...], w_ref[...],
                   preferred_element_type=jnp.float32) + b_ref[...]
    raw_ref[...] = conv.astype(raw_ref.dtype)

    # sigmoid via tanh -> stays on the EUP slot (no VALU divide sequence)
    s = 0.5 * (jnp.tanh(0.5 * conv) + 1.0)

    # Grid-cell coordinates from the sublane (spatial) index: row = gy*nx + gx.
    # Exact float math for row < ~2^23 (covers any realistic feature map).
    row = pl.program_id(1) * tn + jax.lax.broadcasted_iota(jnp.int32, conv.shape, 0)
    rowf = row.astype(jnp.float32)
    gy = jnp.floor((rowf + 0.5) * (1.0 / float(nx)))
    gx = rowf - gy * float(nx)

    # Output-channel index along lanes (0,1 = xy; 2,3 = wh; >=4 = scores).
    oc = jax.lax.broadcasted_iota(jnp.int32, conv.shape, 1)

    # Per-anchor (anchor_w*stride, anchor_h*stride) baked as constants, selected
    # by the anchor grid index with scalar selects.
    a = pl.program_id(2)
    aw = jnp.float32(anchors[0][0])
    ah = jnp.float32(anchors[0][1])
    for k in range(1, len(anchors)):
        aw = jnp.where(a == k, jnp.float32(anchors[k][0]), aw)
        ah = jnp.where(a == k, jnp.float32(anchors[k][1]), ah)

    xy = (s * 2.0 - 0.5 + jnp.where(oc == 0, gx, gy)) * stride
    wh = (s * 2.0) ** 2 * jnp.where(oc == 2, aw, ah)
    dec_ref[...] = jnp.where(oc < 2, xy, jnp.where(oc < 4, wh, s))


def _pick_tile(hw, tn_max):
    """Largest spatial tile <= tn_max that is a multiple of 8 and divides hw."""
    if hw <= tn_max:
        return hw
    for t in range(tn_max, 7, -8):          # tn_max is a multiple of 8
        if hw % t == 0:
            return t
    return tn_max  # fallback: padded last tile (masked stores), not hit in practice


def detect_level(x_t, w_t, b_t, *, nx, stride, anchors,
                 tn_max=2048, vmem_limit_bytes=32 * 1024 * 1024):
    """Fused per-level detection head.

    x_t : (bs, hw, C) bf16 activations (NHWC-flattened)
    w_t : (na, C, no) bf16 per-anchor 1x1-conv weights
    b_t : (na, 1, no) f32 per-anchor biases
    Returns raw (bs, na, hw, no) bf16 and dec (bs, na, hw, no) f32 — already in
    the layout the consumer wants, so only free reshapes follow.
    """
    bs, hw, C = x_t.shape
    na, _, no = w_t.shape
    tn = _pick_tile(hw, tn_max)
    n_tiles = pl.cdiv(hw, tn)

    kern = functools.partial(_detect_kernel, nx=nx, stride=float(stride),
                             anchors=anchors, tn=tn)
    raw, dec = pl.pallas_call(
        kern,
        out_shape=(jax.ShapeDtypeStruct((bs, na, hw, no), jnp.bfloat16),
                   jax.ShapeDtypeStruct((bs, na, hw, no), jnp.float32)),
        grid_spec=pltpu.PrefetchScalarGridSpec(
            num_scalar_prefetch=0,
            grid=(bs, n_tiles, na),
            in_specs=[
                # x block index does not change across the (innermost) anchor
                # axis, so it is not re-fetched per anchor.
                pl.BlockSpec((None, tn, C), lambda b, j, a: (b, j, 0)),
                pl.BlockSpec((None, C, no), lambda b, j, a: (a, 0, 0)),
                pl.BlockSpec((None, 1, no), lambda b, j, a: (a, 0, 0)),
            ],
            out_specs=[
                pl.BlockSpec((None, None, tn, no), lambda b, j, a: (b, a, j, 0)),
                pl.BlockSpec((None, None, tn, no), lambda b, j, a: (b, a, j, 0)),
            ]),
        compiler_params=pltpu.CompilerParams(
            dimension_semantics=("parallel", "parallel", "parallel"),
            vmem_limit_bytes=vmem_limit_bytes),
    )(x_t, w_t, b_t)
    return raw, dec


# ----------------------------------------------------------------------------
# Detect module (JAX wrapper; the hot path is the fused kernel above)
# ----------------------------------------------------------------------------
class DetectPallas:
    def __init__(self, nc=20, anchors=(), ch=(), stride=(), key=None):
        self.nc = nc
        self.no = nc + 5
        self.nl = len(anchors)
        self.na = len(anchors[0]) // 2
        self.stride = [float(s) for s in stride]

        anchors_np = np.asarray(anchors, np.float32).reshape(self.nl, -1, 2)
        # anchor sizes in pixels (anchor * stride), per level, as Python constants
        self.anchor_px = [
            [(float(anchors_np[i, a, 0] * self.stride[i]),
              float(anchors_np[i, a, 1] * self.stride[i]))
             for a in range(self.na)]
            for i in range(self.nl)
        ]
        self.anchors_jnp = jnp.asarray(anchors_np)
        self.stride_jnp = jnp.asarray(self.stride, jnp.float32)

        nout = self.na * self.no
        keys = jax.random.split(key, 2 * self.nl)
        self.w_t, self.b_t = [], []
        self.w_ref, self.b_ref = [], []     # f32 views for the pure-JAX reference
        for i, c in enumerate(ch):
            w = 0.01 * jax.random.normal(keys[2 * i], (nout, c), jnp.float32)
            b = 0.01 * jax.random.normal(keys[2 * i + 1], (nout,), jnp.float32)
            w_bf = w.astype(jnp.bfloat16)                       # MXU-native weights
            # (na*no, C) -> (na, C, no): one (C, no) MXU tile per anchor grid step
            self.w_t.append(jnp.transpose(w_bf.reshape(self.na, self.no, c), (0, 2, 1)))
            self.b_t.append(b.reshape(self.na, 1, self.no))
            self.w_ref.append(w_bf.astype(jnp.float32))         # same rounded values
            self.b_ref.append(b)

    def __call__(self, x):
        """x: list of nl NCHW f32 arrays. Returns (cat(z, 1), list of raw heads)."""
        z, outs = [], []
        for i in range(self.nl):
            bs, c, ny, nx = x[i].shape
            hw = ny * nx
            # NCHW f32 -> (bs, hw, C) bf16 in ONE fused XLA pass (transpose+convert).
            # TODO(synk): have the upstream conv emit NHWC/bf16 so this pass disappears.
            x_t = jnp.transpose(x[i], (0, 2, 3, 1)).reshape(bs, hw, c).astype(jnp.bfloat16)
            raw, dec = detect_level(x_t, self.w_t[i], self.b_t[i],
                                    nx=nx, stride=self.stride[i],
                                    anchors=self.anchor_px[i])
            # Only free reshapes below — no post-kernel transpose passes.
            outs.append(raw.reshape(bs, self.na, ny, nx, self.no))   # bf16 raw head
            z.append(dec.reshape(bs, self.na * hw, self.no))
        return jnp.concatenate(z, axis=1), outs


# ----------------------------------------------------------------------------
# Pure-JAX reference (mirrors the PyTorch forward) for correctness checking
# ----------------------------------------------------------------------------
def detect_reference(det, x):
    z, outs = [], []
    for i in range(det.nl):
        bs, c, ny, nx = x[i].shape
        conv = (jnp.einsum("bchw,oc->bohw", x[i], det.w_ref[i])
                + det.b_ref[i][None, :, None, None])
        xi = conv.reshape(bs, det.na, det.no, ny, nx).transpose(0, 1, 3, 4, 2)
        outs.append(xi)
        yv, xv = jnp.meshgrid(jnp.arange(ny), jnp.arange(nx), indexing="ij")
        grid = jnp.stack((xv, yv), 2).astype(jnp.float32)[None, None]   # (1,1,ny,nx,2)
        ag = (det.anchors_jnp[i] * det.stride_jnp[i]).reshape(1, det.na, 1, 1, 2)
        y = jax.nn.sigmoid(xi)
        xy = (y[..., 0:2] * 2 - 0.5 + grid) * det.stride_jnp[i]
        wh = (y[..., 2:4] * 2) ** 2 * ag
        y = jnp.concatenate([xy, wh, y[..., 4:]], -1)
        z.append(y.reshape(bs, -1, det.no))
    return jnp.concatenate(z, 1), outs


if __name__ == "__main__":
    master = jax.random.PRNGKey(0)
    kw, kx = jax.random.split(master, 2)

    nc = 20  # -> no = 25
    anchors = (
        (10, 13, 16, 30, 33, 23),
        (30, 61, 62, 45, 59, 119),
        (116, 90, 156, 198, 373, 326),
    )
    ch = (4, 8, 16)
    stride = (8.0, 16.0, 32.0)
    sizes = (16, 8, 4)
    bs = 2

    det = DetectPallas(nc=nc, anchors=anchors, ch=ch, stride=stride, key=kw)

    kxs = jax.random.split(kx, 3)
    x = [jax.random.normal(kxs[i], (bs, ch[i], sizes[i], sizes[i]), jnp.float32)
         for i in range(3)]

    z, outs = det(x)
    jax.block_until_ready(z)
    for o in outs:
        jax.block_until_ready(o)

    z_ref, outs_ref = detect_reference(det, x)
    assert z.shape == (bs, 3 * (16 * 16 + 8 * 8 + 4 * 4), nc + 5)
    # Tolerances account for bf16 activations/weights and bf16 raw storage
    # (accumulation and all decode math remain f32).
    z_np = np.asarray(z, dtype=np.float32)
    z_ref_np = np.asarray(z_ref, dtype=np.float32)
    assert np.allclose(z_np, z_ref_np, atol=2e-2, rtol=2e-2), \
        float(np.max(np.abs(z_np - z_ref_np)))
    for got, ref in zip(outs, outs_ref):
        g = np.asarray(got, dtype=np.float32)
        r = np.asarray(ref, dtype=np.float32)
        assert got.shape == ref.shape
        assert np.allclose(g, r, atol=2e-2, rtol=2e-2), float(np.max(np.abs(g - r)))

    print("KERNEL_OK")
</pallas_src>

<mosaic_0001>
module attributes {stable_mosaic.version = 11 : i64} {
  func.func @_detect_kernel(%arg0: i32, %arg1: i32, %arg2: i32, %arg3: memref<1x256x4xbf16, #tpu.memory_space<vmem>>, %arg4: memref<1x4x25xbf16, #tpu.memory_space<vmem>>, %arg5: memref<1x1x25xf32, #tpu.memory_space<vmem>>, %arg6: memref<1x1x256x25xbf16, #tpu.memory_space<vmem>>, %arg7: memref<1x1x256x25xf32, #tpu.memory_space<vmem>>) attributes {dimension_semantics = [#tpu.dimension_semantics<parallel>, #tpu.dimension_semantics<parallel>, #tpu.dimension_semantics<parallel>], iteration_bounds = array<i64: 2, 1, 3>, scalar_prefetch = 0 : i64, scratch_operands = 0 : i64, tpu.core_type = #tpu.core_type<tc>, window_params = [{transform_indices = @transform_0, window_bounds = array<i64: 1, 256, 4>}, {transform_indices = @transform_1, window_bounds = array<i64: 1, 4, 25>}, {transform_indices = @transform_2, window_bounds = array<i64: 1, 1, 25>}, {transform_indices = @transform_3, window_bounds = array<i64: 1, 1, 256, 25>}, {transform_indices = @transform_4, window_bounds = array<i64: 1, 1, 256, 25>}]} {
    %c0 = arith.constant 0 : index
    %c0_0 = arith.constant 0 : index
    %c0_1 = arith.constant 0 : index
    %0 = vector.load %arg3[%c0, %c0_0, %c0_1] : memref<1x256x4xbf16, #tpu.memory_space<vmem>>, vector<1x256x4xbf16>
    %1 = vector.shape_cast %0 : vector<1x256x4xbf16> to vector<256x4xbf16>
    %c0_2 = arith.constant 0 : index
    %c0_3 = arith.constant 0 : index
    %c0_4 = arith.constant 0 : index
    %2 = vector.load %arg4[%c0_2, %c0_3, %c0_4] : memref<1x4x25xbf16, #tpu.memory_space<vmem>>, vector<1x4x25xbf16>
    %3 = vector.shape_cast %2 : vector<1x4x25xbf16> to vector<4x25xbf16>
    %cst = arith.constant dense<0.000000e+00> : vector<256x25xf32>
    %4 = tpu.matmul %1, %3, %cst {dimension_numbers = #tpu.dot_dimension_numbers<[1], [0], [0], [1], [0, 0, 1, 1], [], []>} : vector<256x4xbf16>, vector<4x25xbf16>, vector<256x25xf32> -> vector<256x25xf32>
    %c0_5 = arith.constant 0 : index
    %c0_6 = arith.constant 0 : index
    %c0_7 = arith.constant 0 : index
    %5 = vector.load %arg5[%c0_5, %c0_6, %c0_7] : memref<1x1x25xf32, #tpu.memory_space<vmem>>, vector<1x1x25xf32>
    %6 = vector.shape_cast %5 : vector<1x1x25xf32> to vector<1x25xf32>
    %7 = vector.broadcast %6 : vector<1x25xf32> to vector<256x25xf32>
    %8 = arith.addf %4, %7 : vector<256x25xf32>
    %9 = arith.truncf %8 : vector<256x25xf32> to vector<256x25xbf16>
    %c0_8 = arith.constant 0 : index
    %c0_9 = arith.constant 0 : index
    %c0_10 = arith.constant 0 : index
    %c0_11 = arith.constant 0 : index
    %10 = vector.load %arg6[%c0_8, %c0_9, %c0_10, %c0_11] : memref<1x1x256x25xbf16, #tpu.memory_space<vmem>>, vector<1x1x256x25xbf16>
    %11 = vector.shape_cast %10 : vector<1x1x256x25xbf16> to vector<256x25xbf16>
    %12 = vector.shape_cast %9 : vector<256x25xbf16> to vector<1x1x256x25xbf16>
    tpu.vector_store %arg6[%c0_8, %c0_9, %c0_10, %c0_11], %12 {strides = array<i32>} : memref<1x1x256x25xbf16, #tpu.memory_space<vmem>>, vector<1x1x256x25xbf16>,
    %cst_12 = arith.constant 5.000000e-01 : f32
    %13 = vector.broadcast %cst_12 : f32 to vector<256x25xf32>
    %14 = arith.mulf %13, %8 : vector<256x25xf32>
    %15 = math.tanh %14 : vector<256x25xf32>
    %cst_13 = arith.constant 1.000000e+00 : f32
    %16 = vector.broadcast %cst_13 : f32 to vector<256x25xf32>
    %17 = arith.addf %15, %16 : vector<256x25xf32>
    %cst_14 = arith.constant 5.000000e-01 : f32
    %18 = vector.broadcast %cst_14 : f32 to vector<256x25xf32>
    %19 = arith.mulf %18, %17 : vector<256x25xf32>
    %c256_i32 = arith.constant 256 : i32
    %20 = arith.muli %arg1, %c256_i32 : i32
    %21 = tpu.iota {dimensions = array<i32: 0>} : vector<256x25xi32>
    %22 = vector.broadcast %20 : i32 to vector<256x25xi32>
    %23 = arith.addi %22, %21 : vector<256x25xi32>
    %24 = arith.sitofp %23 : vector<256x25xi32> to vector<256x25xf32>
    %cst_15 = arith.constant 5.000000e-01 : f32
    %25 = vector.broadcast %cst_15 : f32 to vector<256x25xf32>
    %26 = arith.addf %24, %25 : vector<256x25xf32>
    %cst_16 = arith.constant 6.250000e-02 : f32
    %27 = vector.broadcast %cst_16 : f32 to vector<256x25xf32>
    %28 = arith.mulf %26, %27 : vector<256x25xf32>
    %29 = math.floor %28 : vector<256x25xf32>
    %cst_17 = arith.constant 1.600000e+01 : f32
    %30 = vector.broadcast %cst_17 : f32 to vector<256x25xf32>
    %31 = arith.mulf %29, %30 : vector<256x25xf32>
    %32 = arith.subf %24, %31 : vector<256x25xf32>
    %33 = tpu.iota {dimensions = array<i32: 1>} : vector<256x25xi32>
    %c1_i32 = arith.constant 1 : i32
    %34 = arith.cmpi eq, %arg2, %c1_i32 : i32
    %cst_18 = arith.constant 1.280000e+02 : f32
    %cst_19 = arith.constant 8.000000e+01 : f32
    %35 = arith.select %34, %cst_18, %cst_19 : f32
    %c1_i32_20 = arith.constant 1 : i32
    %36 = arith.cmpi eq, %arg2, %c1_i32_20 : i32
    %cst_21 = arith.constant 2.400000e+02 : f32
    %cst_22 = arith.constant 1.040000e+02 : f32
    %37 = arith.select %36, %cst_21, %cst_22 : f32
    %c2_i32 = arith.constant 2 : i32
    %38 = arith.cmpi eq, %arg2, %c2_i32 : i32
    %cst_23 = arith.constant 2.640000e+02 : f32
    %39 = arith.select %38, %cst_23, %35 : f32
    %c2_i32_24 = arith.constant 2 : i32
    %40 = arith.cmpi eq, %arg2, %c2_i32_24 : i32
    %cst_25 = arith.constant 1.840000e+02 : f32
    %41 = arith.select %40, %cst_25, %37 : f32
    %cst_26 = arith.constant 2.000000e+00 : f32
    %42 = vector.broadcast %cst_26 : f32 to vector<256x25xf32>
    %43 = arith.mulf %19, %42 : vector<256x25xf32>
    %cst_27 = arith.constant 5.000000e-01 : f32
    %44 = vector.broadcast %cst_27 : f32 to vector<256x25xf32>
    %45 = arith.subf %43, %44 : vector<256x25xf32>
    %c0_i32 = arith.constant 0 : i32
    %46 = vector.broadcast %c0_i32 : i32 to vector<256x25xi32>
    %47 = arith.cmpi eq, %33, %46 : vector<256x25xi32>
    %48 = arith.select %47, %32, %29 : vector<256x25xi1>, vector<256x25xf32>
    %49 = arith.addf %45, %48 : vector<256x25xf32>
    %cst_28 = arith.constant 8.000000e+00 : f32
    %50 = vector.broadcast %cst_28 : f32 to vector<256x25xf32>
    %51 = arith.mulf %49, %50 : vector<256x25xf32>
    %cst_29 = arith.constant 2.000000e+00 : f32
    %52 = vector.broadcast %cst_29 : f32 to vector<256x25xf32>
    %53 = arith.mulf %19, %52 : vector<256x25xf32>
    %54 = arith.mulf %53, %53 : vector<256x25xf32>
    %c2_i32_30 = arith.constant 2 : i32
    %55 = vector.broadcast %c2_i32_30 : i32 to vector<256x25xi32>
    %56 = arith.cmpi eq, %33, %55 : vector<256x25xi32>
    %57 = vector.broadcast %39 : f32 to vector<256x25xf32>
    %58 = vector.broadcast %41 : f32 to vector<256x25xf32>
    %59 = arith.select %56, %57, %58 : vector<256x25xi1>, vector<256x25xf32>
    %60 = arith.mulf %54, %59 : vector<256x25xf32>
    %c2_i32_31 = arith.constant 2 : i32
    %61 = vector.broadcast %c2_i32_31 : i32 to vector<256x25xi32>
    %62 = arith.cmpi slt, %33, %61 : vector<256x25xi32>
    %c4_i32 = arith.constant 4 : i32
    %63 = vector.broadcast %c4_i32 : i32 to vector<256x25xi32>
    %64 = arith.cmpi slt, %33, %63 : vector<256x25xi32>
    %65 = arith.select %64, %60, %19 : vector<256x25xi1>, vector<256x25xf32>
    %66 = arith.select %62, %51, %65 : vector<256x25xi1>, vector<256x25xf32>
    %c0_32 = arith.constant 0 : index
    %c0_33 = arith.constant 0 : index
    %c0_34 = arith.constant 0 : index
    %c0_35 = arith.constant 0 : index
    %67 = vector.load %arg7[%c0_32, %c0_33, %c0_34, %c0_35] : memref<1x1x256x25xf32, #tpu.memory_space<vmem>>, vector<1x1x256x25xf32>
    %68 = vector.shape_cast %67 : vector<1x1x256x25xf32> to vector<256x25xf32>
    %69 = vector.shape_cast %66 : vector<256x25xf32> to vector<1x1x256x25xf32>
    tpu.vector_store %arg7[%c0_32, %c0_33, %c0_34, %c0_35], %69 {strides = array<i32>} : memref<1x1x256x25xf32, #tpu.memory_space<vmem>>, vector<1x1x256x25xf32>,
    return
  }
  func.func @transform_0(%arg0: i32, %arg1: i32, %arg2: i32) -> (i32, i32, i32) {
    %c0_i32 = arith.constant 0 : i32
    %c0_i32_0 = arith.constant 0 : i32
    return %arg0, %arg1, %c0_i32 : i32, i32, i32
  }
  func.func @transform_1(%arg0: i32, %arg1: i32, %arg2: i32) -> (i32, i32, i32) {
    %c0_i32 = arith.constant 0 : i32
    %c0_i32_0 = arith.constant 0 : i32
    %c0_i32_1 = arith.constant 0 : i32
    return %arg2, %c0_i32, %c0_i32_0 : i32, i32, i32
  }
  func.func @transform_2(%arg0: i32, %arg1: i32, %arg2: i32) -> (i32, i32, i32) {
    %c0_i32 = arith.constant 0 : i32
    %c0_i32_0 = arith.constant 0 : i32
    %c0_i32_1 = arith.constant 0 : i32
    return %arg2, %c0_i32, %c0_i32_0 : i32, i32, i32
  }
  func.func @transform_3(%arg0: i32, %arg1: i32, %arg2: i32) -> (i32, i32, i32, i32) {
    %c0_i32 = arith.constant 0 : i32
    %c0_i32_0 = arith.constant 0 : i32
    return %arg0, %arg2, %arg1, %c0_i32 : i32, i32, i32, i32
  }
  func.func @transform_4(%arg0: i32, %arg1: i32, %arg2: i32) -> (i32, i32, i32, i32) {
    %c0_i32 = arith.constant 0 : i32
    %c0_i32_0 = arith.constant 0 : i32
    return %arg0, %arg2, %arg1, %c0_i32 : i32, i32, i32, i32
  }
}

</mosaic_0001>

<llo_original>
// kernel: tpu_custom_call.1
$region0: #{tpu_custom_call.1}
  #allocation0 [shape = 'u32[]', space=smem, size = 0x4, offset = 0x4, fixed_abs, tag = 'smem constant byte address 0x4 - core index']
  #allocation1 [shape = 'u32[144,128]{1,0:T(1,128)}', space=vmem, size = 0x12000, scoped, tag = 'internal scratch']
  %s0 = inlined_call_operand.vmem [shape: bf16[2,256,4], index: 0, kind: input, shape index: {}]
  %s1 = inlined_call_operand.vmem [shape: bf16[3,4,25], index: 1, kind: input, shape index: {}]
  %s2 = inlined_call_operand.vmem [shape: f32[3,1,25], index: 2, kind: input, shape index: {}]
  %s3 = inlined_call_operand.vmem [shape: bf16[2,3,256,25], index: 3, kind: output, shape index: {0}]
  %s4 = inlined_call_operand.vmem [shape: f32[2,3,256,25], index: 4, kind: output, shape index: {1}]
  %5 = xla_tuple %s3, %s4
  %s6 = sld [smem:[#allocation0]]
  $region53: #{tpu_custom_call.1} parent=0
    _
  %s8 = ssub.s32 1, %s6
  %s9 = scalar_select 0, %s8, %s6
  loop: start=0, step=1, limit=8
  $region2: #{tpu_custom_call.1} parent=0 // loop_pre_header
    _
  $region3: #{tpu_custom_call.1} parent=0 // loop_header
    %s11 = sphi 0, %s15
    %p12 = scmp.ge.s32.totalorder %s11, 8
    %s18 = sphi 0, %s37
    %s19 = sphi 0, %s33
    %s20 = sphi 0, %s29
    %s21 = sphi 0, %s18
    %s22 = sphi 0, %s19
    %s23 = sphi 0, %s20
    %s24 = sphi 0, %s21
    %s25 = sphi 0, %s22
    %s26 = sphi 0, %s23
    %s42 = sphi 0, %s44
    %s45 = sphi 0, %s42
    %s46 = sphi 0, %s45
    %s62 = sphi 0, %s46
    %s68 = sphi 0, %s70
    %s71 = sphi 0, %s68
    %s72 = sphi 0, %s71
    %s88 = sphi 0, %s72
    %s94 = sphi 0, %s96
    %s97 = sphi 0, %s94
    %s98 = sphi 0, %s97
    %s114 = sphi 0, %s98
    %s124 = sphi 0, %s126
    %s127 = sphi 0, %s124
    %s128 = sphi 0, %s127
    %s144 = sphi 0, %s128
    %s154 = sphi 0, %s156
    %s157 = sphi 0, %s154
    %s158 = sphi 0, %s157
    %s174 = sphi 0, %s158
  $region4: #{tpu_custom_call.1} parent=0 // loop_header_branch
    %14 = sbr.rel (%p12) target = $region8
  $region5: #{tpu_custom_call.1} parent=0 // loop_body
    %s16 = ssub.s32 %s11, 1
    %s17 = ssub.s32 %s11, 2
    %s27 = sadd.s32 1, %s20
    %p28 = scmp.ge.s32.totalorder %s27, 3
    %s29 = scalar_select %p28, 0, %s27
    %s30 = sadd.s32 1, %s19
    %s31 = scalar_select %p28, %s30, %s19
    %p32 = scmp.ge.s32.totalorder %s31, 1
    %s33 = scalar_select %p32, 0, %s31
    %s34 = sadd.s32 1, %s18
    %s35 = scalar_select %p32, %s34, %s18
    %p36 = scmp.ge.s32.totalorder %s35, 2
    %s37 = scalar_select %p36, 0, %s35
    %s38 = ssub.s32 %s18, %s37
    %s39 = ssub.s32 %s19, %s33
    %s40 = sor.u32 %s38, %s39
    %p41 = scmp.eq.s32.totalorder %s40, 0
    %s43 = sadd.s32 %s42, 1
    %s44 = scalar_select %p41, %s42, %s43
    %p47 = pneg %p41
    %p48 = scmp.eq.s32.totalorder %s11, 5
    %p49 = por %p47, %p48
    %p50 = scmp.ne.s32.totalorder %s42, %s45
    %p51 = scmp.eq.s32.totalorder %s11, 0
    %p52 = por %p50, %p51
    %p53 = scmp.ne.s32.totalorder %s42, %s45
    %p54 = scmp.eq.s32.totalorder %s16, 5
    %p55 = por %p53, %p54
    %p56 = scmp.ne.s32.totalorder %s45, %s46
    %p57 = scmp.eq.s32.totalorder %s16, 0
    %p58 = por %p56, %p57
    %p59 = scmp.ne.s32.totalorder %s45, %s46
    %p60 = scmp.eq.s32.totalorder %s17, 5
    %p61 = por %p59, %p60
    %p63 = scmp.ne.s32.totalorder %s46, %s62
    %p64 = scmp.eq.s32.totalorder %s17, 0
    %p65 = por %p63, %p64
    %s66 = ssub.s32 %s20, %s29
    %p67 = scmp.eq.s32.totalorder %s66, 0
    %s69 = sadd.s32 %s68, 1
    %s70 = scalar_select %p67, %s68, %s69
    %p73 = pneg %p67
    %p74 = scmp.eq.s32.totalorder %s11, 5
    %p75 = por %p73, %p74
    %p76 = scmp.ne.s32.totalorder %s68, %s71
    %p77 = scmp.eq.s32.totalorder %s11, 0
    %p78 = por %p76, %p77
    %p79 = scmp.ne.s32.totalorder %s68, %s71
    %p80 = scmp.eq.s32.totalorder %s16, 5
    %p81 = por %p79, %p80
    %p82 = scmp.ne.s32.totalorder %s71, %s72
    %p83 = scmp.eq.s32.totalorder %s16, 0
    %p84 = por %p82, %p83
    %p85 = scmp.ne.s32.totalorder %s71, %s72
    %p86 = scmp.eq.s32.totalorder %s17, 5
    %p87 = por %p85, %p86
    %p89 = scmp.ne.s32.totalorder %s72, %s88
    %p90 = scmp.eq.s32.totalorder %s17, 0
    %p91 = por %p89, %p90
    %s92 = ssub.s32 %s20, %s29
    %p93 = scmp.eq.s32.totalorder %s92, 0
    %s95 = sadd.s32 %s94, 1
    %s96 = scalar_select %p93, %s94, %s95
    %p99 = pneg %p93
    %p100 = scmp.eq.s32.totalorder %s11, 5
    %p101 = por %p99, %p100
    %p102 = scmp.ne.s32.totalorder %s94, %s97
    %p103 = scmp.eq.s32.totalorder %s11, 0
    %p104 = por %p102, %p103
    %p105 = scmp.ne.s32.totalorder %s94, %s97
    %p106 = scmp.eq.s32.totalorder %s16, 5
    %p107 = por %p105, %p106
    %p108 = scmp.ne.s32.totalorder %s97, %s98
    %p109 = scmp.eq.s32.totalorder %s16, 0
    %p110 = por %p108, %p109
    %p111 = scmp.ne.s32.totalorder %s97, %s98
    %p112 = scmp.eq.s32.totalorder %s17, 5
    %p113 = por %p111, %p112
    %p115 = scmp.ne.s32.totalorder %s98, %s114
    %p116 = scmp.eq.s32.totalorder %s17, 0
    %p117 = por %p115, %p116
    %s118 = ssub.s32 %s18, %s37
    %s119 = ssub.s32 %s20, %s29
    %s120 = sor.u32 %s118, %s119
    %s121 = ssub.s32 %s19, %s33
    %s122 = sor.u32 %s120, %s121
    %p123 = scmp.eq.s32.totalorder %s122, 0
    %s125 = sadd.s32 %s124, 1
    %s126 = scalar_select %p123, %s124, %s125
    %p129 = pneg %p123
    %p130 = scmp.eq.s32.totalorder %s11, 5
    %p131 = por %p129, %p130
    %p132 = scmp.ne.s32.totalorder %s124, %s127
    %p133 = scmp.eq.s32.totalorder %s11, 0
    %p134 = por %p132, %p133
    %p135 = scmp.ne.s32.totalorder %s124, %s127
    %p136 = scmp.eq.s32.totalorder %s16, 5
    %p137 = por %p135, %p136
    %p138 = scmp.ne.s32.totalorder %s127, %s128
    %p139 = scmp.eq.s32.totalorder %s16, 0
    %p140 = por %p138, %p139
    %p141 = scmp.ne.s32.totalorder %s127, %s128
    %p142 = scmp.eq.s32.totalorder %s17, 5
    %p143 = por %p141, %p142
    %p145 = scmp.ne.s32.totalorder %s128, %s144
    %p146 = scmp.eq.s32.totalorder %s17, 0
    %p147 = por %p145, %p146
    %s148 = ssub.s32 %s18, %s37
    %s149 = ssub.s32 %s20, %s29
    %s150 = sor.u32 %s148, %s149
    %s151 = ssub.s32 %s19, %s33
    %s152 = sor.u32 %s150, %s151
    %p153 = scmp.eq.s32.totalorder %s152, 0
    %s155 = sadd.s32 %s154, 1
    %s156 = scalar_select %p153, %s154, %s155
    %p159 = pneg %p153
    %p160 = scmp.eq.s32.totalorder %s11, 5
    %p161 = por %p159, %p160
    %p162 = scmp.ne.s32.totalorder %s154, %s157
    %p163 = scmp.eq.s32.totalorder %s11, 0
    %p164 = por %p162, %p163
    %p165 = scmp.ne.s32.totalorder %s154, %s157
    %p166 = scmp.eq.s32.totalorder %s16, 5
    %p167 = por %p165, %p166
    %p168 = scmp.ne.s32.totalorder %s157, %s158
    %p169 = scmp.eq.s32.totalorder %s16, 0
    %p170 = por %p168, %p169
    %p171 = scmp.ne.s32.totalorder %s157, %s158
    %p172 = scmp.eq.s32.totalorder %s17, 5
    %p173 = por %p171, %p172
    %p175 = scmp.ne.s32.totalorder %s158, %s174
    %p176 = scmp.eq.s32.totalorder %s17, 0
    %p177 = por %p175, %p176
    %p178 = scmp.le.s32.totalorder 1, %s11
    %p179 = scmp.lt.s32.totalorder %s11, 7
    %p180 = pnand %p178, %p179
    %p181 = pneg %p180
    // Predicated region
    $region9: #{tpu_custom_call.1} parent=5 // pred_check
      _
    $region10: #{tpu_custom_call.1} parent=5 // pred_check_branch
      %183 = sbr.rel (%p180) target = $region12
    $region11: #{tpu_custom_call.1} parent=5 // pred_region
      %s184 = ssub.s32 %s11, 1
    $region12: #{tpu_custom_call.1} parent=5 // pred_fallthru
      _
    %p185 = scmp.lt.s32.totalorder %s11, 6
    // Predicated region
    $region13: #{tpu_custom_call.1} parent=5 // pred_check
      %p186 = pneg %p185
    $region14: #{tpu_custom_call.1} parent=5 // pred_check_branch
      %188 = sbr.rel (%p186) target = $region16
    $region15: #{tpu_custom_call.1} parent=5 // pred_region
      // Predicated region
      $region17: #{tpu_custom_call.1} parent=15 // pred_check
        %p189 = pneg %p52
      $region18: #{tpu_custom_call.1} parent=15 // pred_check_branch
        %191 = sbr.rel (%p189) target = $region20
      $region19: #{tpu_custom_call.1} parent=15 // pred_region
        %s192 = smul.u32 32, %s19
        %p193 = scmp.lt.s32.totalorder %s18, 1
        %s194 = scalar_select %p193, %s18, 1
        %p195 = scmp.lt.s32.totalorder %s192, 31
        %s196 = scalar_select %p195, %s192, 31
        %s197 = smul.addr %s194, 32
        %s198 = sadd.s32 %s196, %s197
        %s199 = smul.addr %s198, 4
        %s200 = scalar_lea.vmem %s0, %s199
        %s201 = smul.u32 32, %s19
      $region20: #{tpu_custom_call.1} parent=15 // pred_fallthru
        _
      // Predicated region
      $region21: #{tpu_custom_call.1} parent=15 // pred_check
        %p202 = pneg %p78
      $region22: #{tpu_custom_call.1} parent=15 // pred_check_branch
        %204 = sbr.rel (%p202) target = $region24
      $region23: #{tpu_custom_call.1} parent=15 // pred_region
        %p205 = scmp.lt.s32.totalorder %s20, 2
        %s206 = scalar_select %p205, %s20, 2
        %s207 = smul.addr %s206, 2
        %s208 = scalar_lea.vmem %s1, %s207
      $region24: #{tpu_custom_call.1} parent=15 // pred_fallthru
        _
      // Predicated region
      $region25: #{tpu_custom_call.1} parent=15 // pred_check
        %p209 = pneg %p104
      $region26: #{tpu_custom_call.1} parent=15 // pred_check_branch
        %211 = sbr.rel (%p209) target = $region28
      $region27: #{tpu_custom_call.1} parent=15 // pred_region
        %p212 = scmp.lt.s32.totalorder %s20, 2
        %s213 = scalar_select %p212, %s20, 2
        %s214 = scalar_lea.vmem %s2, %s213
      $region28: #{tpu_custom_call.1} parent=15 // pred_fallthru
        _
    $region16: #{tpu_custom_call.1} parent=5 // pred_fallthru
      _
    %p215 = scmp.le.s32.totalorder 1, %s11
    %p216 = scmp.lt.s32.totalorder %s11, 7
    %p217 = pnand %p215, %p216
    %p218 = pneg %p217
    // Predicated region
    $region29: #{tpu_custom_call.1} parent=5 // pred_check
      _
    $region30: #{tpu_custom_call.1} parent=5 // pred_check_branch
      %220 = sbr.rel (%p217) target = $region32
    $region31: #{tpu_custom_call.1} parent=5 // pred_region
      %s221 = ssub.s32 %s11, 1
      %s222 = smul.u32 32, %s22
      %p223 = scmp.lt.s32.totalorder %s21, 1
      %s224 = scalar_select %p223, %s21, 1
      %p225 = scmp.lt.s32.totalorder %s222, 31
      %s226 = scalar_select %p225, %s222, 31
      %s227 = smul.addr %s224, 32
      %s228 = sadd.s32 %s226, %s227
      %s229 = smul.addr %s228, 4
      %s230 = scalar_lea.vmem %s0, %s229
      %p231 = pneg %p58
      %p232 = pneg %p55
      %p233 = scmp.lt.s32.totalorder %s23, 2
      %s234 = scalar_select %p233, %s23, 2
      %s235 = smul.addr %s234, 2
      %s236 = scalar_lea.vmem %s1, %s235
      %p237 = pneg %p84
      %p238 = pneg %p81
      %p239 = scmp.lt.s32.totalorder %s23, 2
      %s240 = scalar_select %p239, %s23, 2
      %s241 = scalar_lea.vmem %s2, %s240
      %p242 = pneg %p110
      %p243 = pneg %p107
      %p244 = pneg %p140
      %p245 = pneg %p137
      %s246 = smul.u32 32, %s22
      %p247 = scmp.lt.s32.totalorder %s21, 1
      %s248 = scalar_select %p247, %s21, 1
      %p249 = scmp.lt.s32.totalorder %s23, 2
      %s250 = scalar_select %p249, %s23, 2
      %p251 = scmp.lt.s32.totalorder %s246, 31
      %s252 = scalar_select %p251, %s246, 31
      %s253 = smul.addr %s250, 32
      %s254 = sadd.s32 %s252, %s253
      %s255 = smul.addr %s248, 96
      %s256 = sadd.s32 %s254, %s255
      %s257 = smul.addr %s256, 4
      %s258 = scalar_lea.vmem %s3, %s257
      %p259 = pneg %p170
      %p260 = pneg %p167
      %s261 = smul.u32 32, %s22
      %p262 = scmp.lt.s32.totalorder %s21, 1
      %s263 = scalar_select %p262, %s21, 1
      %p264 = scmp.lt.s32.totalorder %s23, 2
      %s265 = scalar_select %p264, %s23, 2
      %p266 = scmp.lt.s32.totalorder %s261, 31
      %s267 = scalar_select %p266, %s261, 31
      %s268 = smul.addr %s265, 32
      %s269 = sadd.s32 %s267, %s268
      %s270 = smul.addr %s263, 96
      %s271 = sadd.s32 %s269, %s270
      %s272 = smul.addr %s271, 8
      %s273 = scalar_lea.vmem %s4, %s272
      %s274 = smul.u32 32, %s22
      %p275 = scmp.lt.s32.totalorder %s21, 1
      %s276 = scalar_select %p275, %s21, 1
      %p277 = scmp.lt.s32.totalorder %s274, 31
      %s278 = scalar_select %p277, %s274, 31
      %s279 = smul.addr %s276, 32
      %s280 = sadd.s32 %s278, %s279
      %s281 = smul.addr %s280, 4
      %s282 = scalar_lea.vmem %s0, %s281
      %s283 = smul.u32 32, %s22
      %p284 = scmp.lt.s32.totalorder %s23, 2
      %s285 = scalar_select %p284, %s23, 2
      %s286 = smul.addr %s285, 2
      %s287 = scalar_lea.vmem %s1, %s286
      %p288 = scmp.lt.s32.totalorder %s23, 2
      %s289 = scalar_select %p288, %s23, 2
      %s290 = scalar_lea.vmem %s2, %s289
      %s291 = smul.u32 32, %s22
      %p292 = scmp.lt.s32.totalorder %s21, 1
      %s293 = scalar_select %p292, %s21, 1
      %p294 = scmp.lt.s32.totalorder %s23, 2
      %s295 = scalar_select %p294, %s23, 2
      %p296 = scmp.lt.s32.totalorder %s291, 31
      %s297 = scalar_select %p296, %s291, 31
      %s298 = smul.addr %s295, 32
      %s299 = sadd.s32 %s297, %s298
      %s300 = smul.addr %s293, 96
      %s301 = sadd.s32 %s299, %s300
      %s302 = smul.addr %s301, 4
      %s303 = scalar_lea.vmem %s3, %s302
      %s304 = smul.u32 32, %s22
      %s305 = smul.u32 32, %s22
      %p306 = scmp.lt.s32.totalorder %s21, 1
      %s307 = scalar_select %p306, %s21, 1
      %p308 = scmp.lt.s32.totalorder %s23, 2
      %s309 = scalar_select %p308, %s23, 2
      %p310 = scmp.lt.s32.totalorder %s305, 31
      %s311 = scalar_select %p310, %s305, 31
      %s312 = smul.addr %s309, 32
      %s313 = sadd.s32 %s311, %s312
      %s314 = smul.addr %s307, 96
      %s315 = sadd.s32 %s313, %s314
      %s316 = smul.addr %s315, 8
      %s317 = scalar_lea.vmem %s4, %s316
      %s318 = smul.u32 32, %s22
      %v320 = vld [vmem:[%s282] sm:$0xf]
      %v321 = vld [vmem:[%s282 + $0x4] sm:$0xf]
      %v322 = vld [vmem:[%s282 + $0x8] sm:$0xf]
      %v323 = vld [vmem:[%s282 + $0xc] sm:$0xf]
      %v324 = vld [vmem:[%s282 + $0x10] sm:$0xf]
      %v325 = vld [vmem:[%s282 + $0x14] sm:$0xf]
      %v326 = vld [vmem:[%s282 + $0x18] sm:$0xf]
      %v327 = vld [vmem:[%s282 + $0x1c] sm:$0xf]
      %v328 = vld [vmem:[%s282 + $0x20] sm:$0xf]
      %v329 = vld [vmem:[%s282 + $0x24] sm:$0xf]
      %v330 = vld [vmem:[%s282 + $0x28] sm:$0xf]
      %v331 = vld [vmem:[%s282 + $0x2c] sm:$0xf]
      %v332 = vld [vmem:[%s282 + $0x30] sm:$0xf]
      %v333 = vld [vmem:[%s282 + $0x34] sm:$0xf]
      %v334 = vld [vmem:[%s282 + $0x38] sm:$0xf]
      %v335 = vld [vmem:[%s282 + $0x3c] sm:$0xf]
      %v336 = vld [vmem:[%s282 + $0x40] sm:$0xf]
      %v337 = vld [vmem:[%s282 + $0x44] sm:$0xf]
      %v338 = vld [vmem:[%s282 + $0x48] sm:$0xf]
      %v339 = vld [vmem:[%s282 + $0x4c] sm:$0xf]
      %v340 = vld [vmem:[%s282 + $0x50] sm:$0xf]
      %v341 = vld [vmem:[%s282 + $0x54] sm:$0xf]
      %v342 = vld [vmem:[%s282 + $0x58] sm:$0xf]
      %v343 = vld [vmem:[%s282 + $0x5c] sm:$0xf]
      %v344 = vld [vmem:[%s282 + $0x60] sm:$0xf]
      %v345 = vld [vmem:[%s282 + $0x64] sm:$0xf]
      %v346 = vld [vmem:[%s282 + $0x68] sm:$0xf]
      %v347 = vld [vmem:[%s282 + $0x6c] sm:$0xf]
      %v348 = vld [vmem:[%s282 + $0x70] sm:$0xf]
      %v349 = vld [vmem:[%s282 + $0x74] sm:$0xf]
      %v350 = vld [vmem:[%s282 + $0x78] sm:$0xf]
      %v351 = vld [vmem:[%s282 + $0x7c] sm:$0xf]
      %v352 = vld [vmem:[%s287] sm:$0x3]
      %v353 = vld [vmem:[%s290] sm:$0x1]
      %v355 = vlaneseq
      %v356 = vshrl.u32 %v355, 7
      %v357 = vsub.s32 0, %v356
      %v358 = vrot.slane %v353, %v357
      %v392 = vunpack.c.l.b16 %v320
      %v393 = vunpack.c.l.b16 %v321
      %v394 = vunpack.c.l.b16 %v322
      %v395 = vunpack.c.l.b16 %v323
      %v396 = vunpack.c.l.b16 %v324
      %v397 = vunpack.c.l.b16 %v325
      %v398 = vunpack.c.l.b16 %v326
      %v399 = vunpack.c.l.b16 %v327
      %v400 = vunpack.c.l.b16 %v328
      %v401 = vunpack.c.l.b16 %v329
      %v402 = vunpack.c.l.b16 %v330
      %v403 = vunpack.c.l.b16 %v331
      %v404 = vunpack.c.l.b16 %v332
      %v405 = vunpack.c.l.b16 %v333
      %v406 = vunpack.c.l.b16 %v334
      %v407 = vunpack.c.l.b16 %v335
      %v408 = vunpack.c.l.b16 %v336
      %v409 = vunpack.c.l.b16 %v337
      %v410 = vunpack.c.l.b16 %v338
      %v411 = vunpack.c.l.b16 %v339
      %v412 = vunpack.c.l.b16 %v340
      %v413 = vunpack.c.l.b16 %v341
      %v414 = vunpack.c.l.b16 %v342
      %v415 = vunpack.c.l.b16 %v343
      %v416 = vunpack.c.l.b16 %v344
      %v417 = vunpack.c.l.b16 %v345
      %v418 = vunpack.c.l.b16 %v346
      %v419 = vunpack.c.l.b16 %v347
      %v420 = vunpack.c.l.b16 %v348
      %v421 = vunpack.c.l.b16 %v349
      %v422 = vunpack.c.l.b16 %v350
      %v423 = vunpack.c.l.b16 %v351
      %v424 = vpack.c.b16 %v393, %v392
      %v425 = vpack.c.b16 %v395, %v394
      %v426 = vpack.c.b16 %v397, %v396
      %v427 = vpack.c.b16 %v399, %v398
      %v428 = vpack.c.b16 %v401, %v400
      %v429 = vpack.c.b16 %v403, %v402
      %v430 = vpack.c.b16 %v405, %v404
      %v431 = vpack.c.b16 %v407, %v406
      %v432 = vpack.c.b16 %v409, %v408
      %v433 = vpack.c.b16 %v411, %v410
      %v434 = vpack.c.b16 %v413, %v412
      %v435 = vpack.c.b16 %v415, %v414
      %v436 = vpack.c.b16 %v417, %v416
      %v437 = vpack.c.b16 %v419, %v418
      %v438 = vpack.c.b16 %v421, %v420
      %v439 = vpack.c.b16 %v423, %v422
      %vm440 = vcmask 31744
      %v442 = vsel %vm440, %v424, 0
      %v445 = vsel %vm440, %v425, 0
      %v448 = vsel %vm440, %v426, 0
      %v451 = vsel %vm440, %v427, 0
      %v454 = vsel %vm440, %v428, 0
      %v457 = vsel %vm440, %v429, 0
      %v460 = vsel %vm440, %v430, 0
      %v463 = vsel %vm440, %v431, 0
      %v466 = vsel %vm440, %v432, 0
      %v469 = vsel %vm440, %v433, 0
      %v472 = vsel %vm440, %v434, 0
      %v475 = vsel %vm440, %v435, 0
      %v478 = vsel %vm440, %v436, 0
      %v481 = vsel %vm440, %v437, 0
      %v484 = vsel %vm440, %v438, 0
      %v487 = vsel %vm440, %v439, 0
      %vm489 = vcmask 1041408
      %v491 = vsel %vm489, %v352, 0
      %493 = vmatprep.subr.bf16.mxu0 0
      %494 = vmatpush1.bf16.msra.mxu0 0
      %495 = vmatprep.subr.bf16.mxu0 0
      %496 = vmatpush1.bf16.msra.mxu0 0
      %497 = vmatprep.subr.bf16.mxu0 0
      %498 = vmatpush1.bf16.msra.mxu0 0
      %499 = vmatprep.subr.bf16.mxu0 0
      %500 = vmatpush1.bf16.msra.mxu0 0
      %501 = vmatprep.subr.bf16.mxu0 0
      %502 = vmatpush1.bf16.msra.mxu0 0
      %503 = vmatprep.subr.bf16.mxu0 0
      %504 = vmatpush1.bf16.msra.mxu0 0
      %505 = vmatprep.subr.bf16.mxu0 0
      %506 = vmatpush1.bf16.msra.mxu0 0
      %507 = vmatprep.subr.bf16.mxu0 0
      %508 = vmatpush1.bf16.msra.mxu0 %v491
      %509 = vmatprep.subr.bf16.mxu0 0
      %510 = vmatpush2.bf16.msra.mxu0 0
      %511 = vmatprep.subr.bf16.mxu0 0
      %512 = vmatpush2.bf16.msra.mxu0 0
      %513 = vmatprep.subr.bf16.mxu0 0
      %514 = vmatpush2.bf16.msra.mxu0 0
      %515 = vmatprep.subr.bf16.mxu0 0
      %516 = vmatpush2.bf16.msra.mxu0 0
      %517 = vmatprep.subr.bf16.mxu0 0
      %518 = vmatpush2.bf16.msra.mxu0 0
      %519 = vmatprep.subr.bf16.mxu0 0
      %520 = vmatpush2.bf16.msra.mxu0 0
      %521 = vmatprep.subr.bf16.mxu0 0
      %522 = vmatpush2.bf16.msra.mxu0 0
      %523 = vmatprep.subr.bf16.mxu0 0
      %524 = vmatpush2.bf16.msra.mxu0 0
      %525 = vmatprep.mubr.bf16.mxu0 0
      %526 = vmatmul.mubr.bf16.gmra.mxu0 %v442
      %v527 = vpop.f32.mrf.mxu0
      %v528 = vadd.f32 %v358, %v527
      %v529 = vpop.f32.mrf.mxu0
      %v530 = vpop.f32.mrf.mxu0
      %v531 = vadd.f32 %v358, %v530
      %v532 = vpop.f32.mrf.mxu0
      %533 = vmatprep.mubr.bf16.mxu0 0
      %534 = vmatmul.mubr.bf16.gmra.mxu0 %v445
      %v535 = vpop.f32.mrf.mxu0
      %v536 = vadd.f32 %v358, %v535
      %v537 = vpop.f32.mrf.mxu0
      %v538 = vpop.f32.mrf.mxu0
      %v539 = vadd.f32 %v358, %v538
      %v540 = vpop.f32.mrf.mxu0
      %541 = vmatprep.mubr.bf16.mxu0 0
      %542 = vmatmul.mubr.bf16.gmra.mxu0 %v448
      %v543 = vpop.f32.mrf.mxu0
      %v544 = vadd.f32 %v358, %v543
      %v545 = vpop.f32.mrf.mxu0
      %v546 = vpop.f32.mrf.mxu0
      %v547 = vadd.f32 %v358, %v546
      %v548 = vpop.f32.mrf.mxu0
      %549 = vmatprep.mubr.bf16.mxu0 0
      %550 = vmatmul.mubr.bf16.gmra.mxu0 %v451
      %v551 = vpop.f32.mrf.mxu0
      %v552 = vadd.f32 %v358, %v551
      %v553 = vpop.f32.mrf.mxu0
      %v554 = vpop.f32.mrf.mxu0
      %v555 = vadd.f32 %v358, %v554
      %v556 = vpop.f32.mrf.mxu0
      %557 = vmatprep.mubr.bf16.mxu0 0
      %558 = vmatmul.mubr.bf16.gmra.mxu0 %v454
      %v559 = vpop.f32.mrf.mxu0
      %v560 = vadd.f32 %v358, %v559
      %v561 = vpop.f32.mrf.mxu0
      %v562 = vpop.f32.mrf.mxu0
      %v563 = vadd.f32 %v358, %v562
      %v564 = vpop.f32.mrf.mxu0
      %565 = vmatprep.mubr.bf16.mxu0 0
      %566 = vmatmul.mubr.bf16.gmra.mxu0 %v457
      %v567 = vpop.f32.mrf.mxu0
      %v568 = vadd.f32 %v358, %v567
      %v569 = vpop.f32.mrf.mxu0
      %v570 = vpop.f32.mrf.mxu0
      %v571 = vadd.f32 %v358, %v570
      %v572 = vpop.f32.mrf.mxu0
      %573 = vmatprep.mubr.bf16.mxu0 0
      %574 = vmatmul.mubr.bf16.gmra.mxu0 %v460
      %v575 = vpop.f32.mrf.mxu0
      %v576 = vadd.f32 %v358, %v575
      %v577 = vpop.f32.mrf.mxu0
      %v578 = vpop.f32.mrf.mxu0
      %v579 = vadd.f32 %v358, %v578
      %v580 = vpop.f32.mrf.mxu0
      %581 = vmatprep.mubr.bf16.mxu0 0
      %582 = vmatmul.mubr.bf16.gmra.mxu0 %v463
      %v583 = vpop.f32.mrf.mxu0
      %v584 = vadd.f32 %v358, %v583
      %v585 = vpop.f32.mrf.mxu0
      %v586 = vpop.f32.mrf.mxu0
      %v587 = vadd.f32 %v358, %v586
      %v588 = vpop.f32.mrf.mxu0
      %589 = vmatprep.mubr.bf16.mxu0 0
      %590 = vmatmul.mubr.bf16.gmra.mxu0 %v466
      %v591 = vpop.f32.mrf.mxu0
      %v592 = vadd.f32 %v358, %v591
      %v593 = vpop.f32.mrf.mxu0
      %v594 = vpop.f32.mrf.mxu0
      %v595 = vadd.f32 %v358, %v594
      %v596 = vpop.f32.mrf.mxu0
      %597 = vmatprep.mubr.bf16.mxu0 0
      %598 = vmatmul.mubr.bf16.gmra.mxu0 %v469
      %v599 = vpop.f32.mrf.mxu0
      %v600 = vadd.f32 %v358, %v599
      %v601 = vpop.f32.mrf.mxu0
      %v602 = vpop.f32.mrf.mxu0
      %v603 = vadd.f32 %v358, %v602
      %v604 = vpop.f32.mrf.mxu0
      %605 = vmatprep.mubr.bf16.mxu0 0
      %606 = vmatmul.mubr.bf16.gmra.mxu0 %v472
      %v607 = vpop.f32.mrf.mxu0
      %v608 = vadd.f32 %v358, %v607
      %v609 = vpop.f32.mrf.mxu0
      %v610 = vpop.f32.mrf.mxu0
      %v611 = vadd.f32 %v358, %v610
      %v612 = vpop.f32.mrf.mxu0
      %613 = vmatprep.mubr.bf16.mxu0 0
      %614 = vmatmul.mubr.bf16.gmra.mxu0 %v475
      %v615 = vpop.f32.mrf.mxu0
      %v616 = vadd.f32 %v358, %v615
      %v617 = vpop.f32.mrf.mxu0
      %v618 = vpop.f32.mrf.mxu0
      %v619 = vadd.f32 %v358, %v618
      %v620 = vpop.f32.mrf.mxu0
      %621 = vmatprep.mubr.bf16.mxu0 0
      %622 = vmatmul.mubr.bf16.gmra.mxu0 %v478
      %v623 = vpop.f32.mrf.mxu0
      %v624 = vadd.f32 %v358, %v623
      %v625 = vpop.f32.mrf.mxu0
      %v626 = vpop.f32.mrf.mxu0
      %v627 = vadd.f32 %v358, %v626
      %v628 = vpop.f32.mrf.mxu0
      %629 = vmatprep.mubr.bf16.mxu0 0
      %630 = vmatmul.mubr.bf16.gmra.mxu0 %v481
      %v631 = vpop.f32.mrf.mxu0
      %v632 = vadd.f32 %v358, %v631
      %v633 = vpop.f32.mrf.mxu0
      %v634 = vpop.f32.mrf.mxu0
      %v635 = vadd.f32 %v358, %v634
      %v636 = vpop.f32.mrf.mxu0
      %637 = vmatprep.mubr.bf16.mxu0 0
      %638 = vmatmul.mubr.bf16.gmra.mxu0 %v484
      %v639 = vpop.f32.mrf.mxu0
      %v640 = vadd.f32 %v358, %v639
      %v641 = vpop.f32.mrf.mxu0
      %v642 = vpop.f32.mrf.mxu0
      %v643 = vadd.f32 %v358, %v642
      %v644 = vpop.f32.mrf.mxu0
      %645 = vmatprep.mubr.bf16.mxu0 0
      %646 = vmatmul.mubr.bf16.gmra.mxu0 %v487
      %v647 = vpop.f32.mrf.mxu0
      %v648 = vadd.f32 %v358, %v647
      %v649 = vpop.f32.mrf.mxu0
      %v650 = vpop.f32.mrf.mxu0
      %v651 = vadd.f32 %v358, %v650
      %v652 = vpop.f32.mrf.mxu0
      %653 = vdwg.mxu0
      %v654 = vpack.c.bf16 %v531, %v528
      %v655 = vpack.c.bf16 %v539, %v536
      %v656 = vpack.c.bf16 %v547, %v544
      %v657 = vpack.c.bf16 %v555, %v552
      %v658 = vpack.c.bf16 %v563, %v560
      %v659 = vpack.c.bf16 %v571, %v568
      %v660 = vpack.c.bf16 %v579, %v576
      %v661 = vpack.c.bf16 %v587, %v584
      %v662 = vpack.c.bf16 %v595, %v592
      %v663 = vpack.c.bf16 %v603, %v600
      %v664 = vpack.c.bf16 %v611, %v608
      %v665 = vpack.c.bf16 %v619, %v616
      %v666 = vpack.c.bf16 %v627, %v624
      %v667 = vpack.c.bf16 %v635, %v632
      %v668 = vpack.c.bf16 %v643, %v640
      %v669 = vpack.c.bf16 %v651, %v648
      %v686 = vunpack.c.l.b16 %v654
      %v687 = vunpack.c.h.b16 %v654
      %v688 = vunpack.c.l.b16 %v655
      %v689 = vunpack.c.h.b16 %v655
      %v690 = vunpack.c.l.b16 %v656
      %v691 = vunpack.c.h.b16 %v656
      %v692 = vunpack.c.l.b16 %v657
      %v693 = vunpack.c.h.b16 %v657
      %v694 = vunpack.c.l.b16 %v658
      %v695 = vunpack.c.h.b16 %v658
      %v696 = vunpack.c.l.b16 %v659
      %v697 = vunpack.c.h.b16 %v659
      %v698 = vunpack.c.l.b16 %v660
      %v699 = vunpack.c.h.b16 %v660
      %v700 = vunpack.c.l.b16 %v661
      %v701 = vunpack.c.h.b16 %v661
      %v702 = vunpack.c.l.b16 %v662
      %v703 = vunpack.c.h.b16 %v662
      %v704 = vunpack.c.l.b16 %v663
      %v705 = vunpack.c.h.b16 %v663
      %v706 = vunpack.c.l.b16 %v664
      %v707 = vunpack.c.h.b16 %v664
      %v708 = vunpack.c.l.b16 %v665
      %v709 = vunpack.c.h.b16 %v665
      %v710 = vunpack.c.l.b16 %v666
      %v711 = vunpack.c.h.b16 %v666
      %v712 = vunpack.c.l.b16 %v667
      %v713 = vunpack.c.h.b16 %v667
      %v714 = vunpack.c.l.b16 %v668
      %v715 = vunpack.c.h.b16 %v668
      %v716 = vunpack.c.l.b16 %v669
      %v717 = vunpack.c.h.b16 %v669
      %v718 = vpack.c.b16 %v686, %v686
      %v719 = vpack.c.b16 %v687, %v687
      %v720 = vpack.c.b16 %v688, %v688
      %v721 = vpack.c.b16 %v689, %v689
      %v722 = vpack.c.b16 %v690, %v690
      %v723 = vpack.c.b16 %v691, %v691
      %v724 = vpack.c.b16 %v692, %v692
      %v725 = vpack.c.b16 %v693, %v693
      %v726 = vpack.c.b16 %v694, %v694
      %v727 = vpack.c.b16 %v695, %v695
      %v728 = vpack.c.b16 %v696, %v696
      %v729 = vpack.c.b16 %v697, %v697
      %v730 = vpack.c.b16 %v698, %v698
      %v731 = vpack.c.b16 %v699, %v699
      %v732 = vpack.c.b16 %v700, %v700
      %v733 = vpack.c.b16 %v701, %v701
      %v734 = vpack.c.b16 %v702, %v702
      %v735 = vpack.c.b16 %v703, %v703
      %v736 = vpack.c.b16 %v704, %v704
      %v737 = vpack.c.b16 %v705, %v705
      %v738 = vpack.c.b16 %v706, %v706
      %v739 = vpack.c.b16 %v707, %v707
      %v740 = vpack.c.b16 %v708, %v708
      %v741 = vpack.c.b16 %v709, %v709
      %v742 = vpack.c.b16 %v710, %v710
      %v743 = vpack.c.b16 %v711, %v711
      %v744 = vpack.c.b16 %v712, %v712
      %v745 = vpack.c.b16 %v713, %v713
      %v746 = vpack.c.b16 %v714, %v714
      %v747 = vpack.c.b16 %v715, %v715
      %v748 = vpack.c.b16 %v716, %v716
      %v749 = vpack.c.b16 %v717, %v717
      %vm782 = vcmask 199680
      %783 = vst.msk [vmem:[%s303] sm:$0xf] %vm782, %v718
      %784 = vst.msk [vmem:[%s303 + $0x4] sm:$0xf] %vm782, %v719
      %785 = vst.msk [vmem:[%s303 + $0x8] sm:$0xf] %vm782, %v720
      %786 = vst.msk [vmem:[%s303 + $0xc] sm:$0xf] %vm782, %v721
      %787 = vst.msk [vmem:[%s303 + $0x10] sm:$0xf] %vm782, %v722
      %788 = vst.msk [vmem:[%s303 + $0x14] sm:$0xf] %vm782, %v723
      %789 = vst.msk [vmem:[%s303 + $0x18] sm:$0xf] %vm782, %v724
      %790 = vst.msk [vmem:[%s303 + $0x1c] sm:$0xf] %vm782, %v725
      %791 = vst.msk [vmem:[%s303 + $0x20] sm:$0xf] %vm782, %v726
      %792 = vst.msk [vmem:[%s303 + $0x24] sm:$0xf] %vm782, %v727
      %793 = vst.msk [vmem:[%s303 + $0x28] sm:$0xf] %vm782, %v728
      %794 = vst.msk [vmem:[%s303 + $0x2c] sm:$0xf] %vm782, %v729
      %795 = vst.msk [vmem:[%s303 + $0x30] sm:$0xf] %vm782, %v730
      %796 = vst.msk [vmem:[%s303 + $0x34] sm:$0xf] %vm782, %v731
      %797 = vst.msk [vmem:[%s303 + $0x38] sm:$0xf] %vm782, %v732
      %798 = vst.msk [vmem:[%s303 + $0x3c] sm:$0xf] %vm782, %v733
      %799 = vst.msk [vmem:[%s303 + $0x40] sm:$0xf] %vm782, %v734
      %800 = vst.msk [vmem:[%s303 + $0x44] sm:$0xf] %vm782, %v735
      %801 = vst.msk [vmem:[%s303 + $0x48] sm:$0xf] %vm782, %v736
      %802 = vst.msk [vmem:[%s303 + $0x4c] sm:$0xf] %vm782, %v737
      %803 = vst.msk [vmem:[%s303 + $0x50] sm:$0xf] %vm782, %v738
      %804 = vst.msk [vmem:[%s303 + $0x54] sm:$0xf] %vm782, %v739
      %805 = vst.msk [vmem:[%s303 + $0x58] sm:$0xf] %vm782, %v740
      %806 = vst.msk [vmem:[%s303 + $0x5c] sm:$0xf] %vm782, %v741
      %807 = vst.msk [vmem:[%s303 + $0x60] sm:$0xf] %vm782, %v742
      %808 = vst.msk [vmem:[%s303 + $0x64] sm:$0xf] %vm782, %v743
      %809 = vst.msk [vmem:[%s303 + $0x68] sm:$0xf] %vm782, %v744
      %810 = vst.msk [vmem:[%s303 + $0x6c] sm:$0xf] %vm782, %v745
      %811 = vst.msk [vmem:[%s303 + $0x70] sm:$0xf] %vm782, %v746
      %812 = vst.msk [vmem:[%s303 + $0x74] sm:$0xf] %vm782, %v747
      %813 = vst.msk [vmem:[%s303 + $0x78] sm:$0xf] %vm782, %v748
      %814 = vst.msk [vmem:[%s303 + $0x7c] sm:$0xf] %vm782, %v749
      %v815 = vmul.f32 %v528, 0.5
      %v816 = vmul.f32 %v531, 0.5
      %v817 = vmul.f32 %v536, 0.5
      %v818 = vmul.f32 %v539, 0.5
      %v819 = vmul.f32 %v544, 0.5
      %v820 = vmul.f32 %v547, 0.5
      %v821 = vmul.f32 %v552, 0.5
      %v822 = vmul.f32 %v555, 0.5
      %v823 = vmul.f32 %v560, 0.5
      %v824 = vmul.f32 %v563, 0.5
      %v825 = vmul.f32 %v568, 0.5
      %v826 = vmul.f32 %v571, 0.5
      %v827 = vmul.f32 %v576, 0.5
      %v828 = vmul.f32 %v579, 0.5
      %v829 = vmul.f32 %v584, 0.5
      %v830 = vmul.f32 %v587, 0.5
      %v831 = vmul.f32 %v592, 0.5
      %v832 = vmul.f32 %v595, 0.5
      %v833 = vmul.f32 %v600, 0.5
      %v834 = vmul.f32 %v603, 0.5
      %v835 = vmul.f32 %v608, 0.5
      %v836 = vmul.f32 %v611, 0.5
      %v837 = vmul.f32 %v616, 0.5
      %v838 = vmul.f32 %v619, 0.5
      %v839 = vmul.f32 %v624, 0.5
      %v840 = vmul.f32 %v627, 0.5
      %v841 = vmul.f32 %v632, 0.5
      %v842 = vmul.f32 %v635, 0.5
      %v843 = vmul.f32 %v640, 0.5
      %v844 = vmul.f32 %v643, 0.5
      %v845 = vmul.f32 %v648, 0.5
      %v846 = vmul.f32 %v651, 0.5
      %v847 = vtanh.pop %v815
      %v848 = vtanh.pop %v816
      %v849 = vtanh.pop %v817
      %v850 = vtanh.pop %v818
      %v851 = vtanh.pop %v819
      %v852 = vtanh.pop %v820
      %v853 = vtanh.pop %v821
      %v854 = vtanh.pop %v822
      %v855 = vtanh.pop %v823
      %v856 = vtanh.pop %v824
      %v857 = vtanh.pop %v825
      %v858 = vtanh.pop %v826
      %v859 = vtanh.pop %v827
      %v860 = vtanh.pop %v828
      %v861 = vtanh.pop %v829
      %v862 = vtanh.pop %v830
      %v863 = vtanh.pop %v831
      %v864 = vtanh.pop %v832
      %v865 = vtanh.pop %v833
      %v866 = vtanh.pop %v834
      %v867 = vtanh.pop %v835
      %v868 = vtanh.pop %v836
      %v869 = vtanh.pop %v837
      %v870 = vtanh.pop %v838
      %v871 = vtanh.pop %v839
      %v872 = vtanh.pop %v840
      %v873 = vtanh.pop %v841
      %v874 = vtanh.pop %v842
      %v875 = vtanh.pop %v843
      %v876 = vtanh.pop %v844
      %v877 = vtanh.pop %v845
      %v878 = vtanh.pop %v846
      %v879 = vadd.f32 %v847, 1.0
      %v880 = vadd.f32 %v848, 1.0
      %v881 = vadd.f32 %v849, 1.0
      %v882 = vadd.f32 %v850, 1.0
      %v883 = vadd.f32 %v851, 1.0
      %v884 = vadd.f32 %v852, 1.0
      %v885 = vadd.f32 %v853, 1.0
      %v886 = vadd.f32 %v854, 1.0
      %v887 = vadd.f32 %v855, 1.0
      %v888 = vadd.f32 %v856, 1.0
      %v889 = vadd.f32 %v857, 1.0
      %v890 = vadd.f32 %v858, 1.0
      %v891 = vadd.f32 %v859, 1.0
      %v892 = vadd.f32 %v860, 1.0
      %v893 = vadd.f32 %v861, 1.0
      %v894 = vadd.f32 %v862, 1.0
      %v895 = vadd.f32 %v863, 1.0
      %v896 = vadd.f32 %v864, 1.0
      %v897 = vadd.f32 %v865, 1.0
      %v898 = vadd.f32 %v866, 1.0
      %v899 = vadd.f32 %v867, 1.0
      %v900 = vadd.f32 %v868, 1.0
      %v901 = vadd.f32 %v869, 1.0
      %v902 = vadd.f32 %v870, 1.0
      %v903 = vadd.f32 %v871, 1.0
      %v904 = vadd.f32 %v872, 1.0
      %v905 = vadd.f32 %v873, 1.0
      %v906 = vadd.f32 %v874, 1.0
      %v907 = vadd.f32 %v875, 1.0
      %v908 = vadd.f32 %v876, 1.0
      %v909 = vadd.f32 %v877, 1.0
      %v910 = vadd.f32 %v878, 1.0
      %v911 = vmul.f32 %v879, 0.5
      %v912 = vmul.f32 %v880, 0.5
      %v913 = vmul.f32 %v881, 0.5
      %v914 = vmul.f32 %v882, 0.5
      %v915 = vmul.f32 %v883, 0.5
      %v916 = vmul.f32 %v884, 0.5
      %v917 = vmul.f32 %v885, 0.5
      %v918 = vmul.f32 %v886, 0.5
      %v919 = vmul.f32 %v887, 0.5
      %v920 = vmul.f32 %v888, 0.5
      %v921 = vmul.f32 %v889, 0.5
      %v922 = vmul.f32 %v890, 0.5
      %v923 = vmul.f32 %v891, 0.5
      %v924 = vmul.f32 %v892, 0.5
      %v925 = vmul.f32 %v893, 0.5
      %v926 = vmul.f32 %v894, 0.5
      %v927 = vmul.f32 %v895, 0.5
      %v928 = vmul.f32 %v896, 0.5
      %v929 = vmul.f32 %v897, 0.5
      %v930 = vmul.f32 %v898, 0.5
      %v931 = vmul.f32 %v899, 0.5
      %v932 = vmul.f32 %v900, 0.5
      %v933 = vmul.f32 %v901, 0.5
      %v934 = vmul.f32 %v902, 0.5
      %v935 = vmul.f32 %v903, 0.5
      %v936 = vmul.f32 %v904, 0.5
      %v937 = vmul.f32 %v905, 0.5
      %v938 = vmul.f32 %v906, 0.5
      %v939 = vmul.f32 %v907, 0.5
      %v940 = vmul.f32 %v908, 0.5
      %v941 = vmul.f32 %v909, 0.5
      %v942 = vmul.f32 %v910, 0.5
      %s943 = smul.u32 %s22, 256
      %v944 = vlaneseq
      %v945 = vshrl.u32 %v944, 7
      %v946 = vadd.s32 %v945, 8
      %v947 = vadd.s32 %v945, 16
      %v948 = vadd.s32 %v945, 24
      %v949 = vadd.s32 %v945, 32
      %v950 = vadd.s32 %v945, 40
      %v951 = vadd.s32 %v945, 48
      %v952 = vadd.s32 %v945, 56
      %v953 = vadd.s32 %v945, 64
      %v954 = vadd.s32 %v945, 72
      %v955 = vadd.s32 %v945, 80
      %v956 = vadd.s32 %v945, 88
      %v957 = vadd.s32 %v945, 96
      %v958 = vadd.s32 %v945, 104
      %v959 = vadd.s32 %v945, 112
      %v960 = vadd.s32 %v945, 120
      %v961 = vadd.s32 %v945, 128
      %v962 = vadd.s32 %v945, 136
      %v963 = vadd.s32 %v945, 144
      %v964 = vadd.s32 %v945, 152
      %v965 = vadd.s32 %v945, 160
      %v966 = vadd.s32 %v945, 168
      %v967 = vadd.s32 %v945, 176
      %v968 = vadd.s32 %v945, 184
      %v969 = vadd.s32 %v945, 192
      %v970 = vadd.s32 %v945, 200
      %v971 = vadd.s32 %v945, 208
      %v972 = vadd.s32 %v945, 216
      %v973 = vadd.s32 %v945, 224
      %v974 = vadd.s32 %v945, 232
      %v975 = vadd.s32 %v945, 240
      %v976 = vadd.s32 %v945, 248
      %v977 = vstv %s943
      %v978 = vadd.s32 %v977, %v945
      %v979 = vadd.s32 %v977, %v946
      %v980 = vadd.s32 %v977, %v947
      %v981 = vadd.s32 %v977, %v948
      %v982 = vadd.s32 %v977, %v949
      %v983 = vadd.s32 %v977, %v950
      %v984 = vadd.s32 %v977, %v951
      %v985 = vadd.s32 %v977, %v952
      %v986 = vadd.s32 %v977, %v953
      %v987 = vadd.s32 %v977, %v954
      %v988 = vadd.s32 %v977, %v955
      %v989 = vadd.s32 %v977, %v956
      %v990 = vadd.s32 %v977, %v957
      %v991 = vadd.s32 %v977, %v958
      %v992 = vadd.s32 %v977, %v959
      %v993 = vadd.s32 %v977, %v960
      %v994 = vadd.s32 %v977, %v961
      %v995 = vadd.s32 %v977, %v962
      %v996 = vadd.s32 %v977, %v963
      %v997 = vadd.s32 %v977, %v964
      %v998 = vadd.s32 %v977, %v965
      %v999 = vadd.s32 %v977, %v966
      %v1000 = vadd.s32 %v977, %v967
      %v1001 = vadd.s32 %v977, %v968
      %v1002 = vadd.s32 %v977, %v969
      %v1003 = vadd.s32 %v977, %v970
      %v1004 = vadd.s32 %v977, %v971
      %v1005 = vadd.s32 %v977, %v972
      %v1006 = vadd.s32 %v977, %v973
      %v1007 = vadd.s32 %v977, %v974
      %v1008 = vadd.s32 %v977, %v975
      %v1009 = vadd.s32 %v977, %v976
      %v1010 = vcvt.s32.f32 %v978
      %v1011 = vcvt.s32.f32 %v979
      %v1012 = vcvt.s32.f32 %v980
      %v1013 = vcvt.s32.f32 %v981
      %v1014 = vcvt.s32.f32 %v982
      %v1015 = vcvt.s32.f32 %v983
      %v1016 = vcvt.s32.f32 %v984
      %v1017 = vcvt.s32.f32 %v985
      %v1018 = vcvt.s32.f32 %v986
      %v1019 = vcvt.s32.f32 %v987
      %v1020 = vcvt.s32.f32 %v988
      %v1021 = vcvt.s32.f32 %v989
      %v1022 = vcvt.s32.f32 %v990
      %v1023 = vcvt.s32.f32 %v991
      %v1024 = vcvt.s32.f32 %v992
      %v1025 = vcvt.s32.f32 %v993
      %v1026 = vcvt.s32.f32 %v994
      %v1027 = vcvt.s32.f32 %v995
      %v1028 = vcvt.s32.f32 %v996
      %v1029 = vcvt.s32.f32 %v997
      %v1030 = vcvt.s32.f32 %v998
      %v1031 = vcvt.s32.f32 %v999
      %v1032 = vcvt.s32.f32 %v1000
      %v1033 = vcvt.s32.f32 %v1001
      %v1034 = vcvt.s32.f32 %v1002
      %v1035 = vcvt.s32.f32 %v1003
      %v1036 = vcvt.s32.f32 %v1004
      %v1037 = vcvt.s32.f32 %v1005
      %v1038 = vcvt.s32.f32 %v1006
      %v1039 = vcvt.s32.f32 %v1007
      %v1040 = vcvt.s32.f32 %v1008
      %v1041 = vcvt.s32.f32 %v1009
      %v1042 = vadd.f32 %v1010, 0.5
      %v1043 = vadd.f32 %v1011, 0.5
      %v1044 = vadd.f32 %v1012, 0.5
      %v1045 = vadd.f32 %v1013, 0.5
      %v1046 = vadd.f32 %v1014, 0.5
      %v1047 = vadd.f32 %v1015, 0.5
      %v1048 = vadd.f32 %v1016, 0.5
      %v1049 = vadd.f32 %v1017, 0.5
      %v1050 = vadd.f32 %v1018, 0.5
      %v1051 = vadd.f32 %v1019, 0.5
      %v1052 = vadd.f32 %v1020, 0.5
      %v1053 = vadd.f32 %v1021, 0.5
      %v1054 = vadd.f32 %v1022, 0.5
      %v1055 = vadd.f32 %v1023, 0.5
      %v1056 = vadd.f32 %v1024, 0.5
      %v1057 = vadd.f32 %v1025, 0.5
      %v1058 = vadd.f32 %v1026, 0.5
      %v1059 = vadd.f32 %v1027, 0.5
      %v1060 = vadd.f32 %v1028, 0.5
      %v1061 = vadd.f32 %v1029, 0.5
      %v1062 = vadd.f32 %v1030, 0.5
      %v1063 = vadd.f32 %v1031, 0.5
      %v1064 = vadd.f32 %v1032, 0.5
      %v1065 = vadd.f32 %v1033, 0.5
      %v1066 = vadd.f32 %v1034, 0.5
      %v1067 = vadd.f32 %v1035, 0.5
      %v1068 = vadd.f32 %v1036, 0.5
      %v1069 = vadd.f32 %v1037, 0.5
      %v1070 = vadd.f32 %v1038, 0.5
      %v1071 = vadd.f32 %v1039, 0.5
      %v1072 = vadd.f32 %v1040, 0.5
      %v1073 = vadd.f32 %v1041, 0.5
      %v1074 = vmul.f32 %v1042, 0.0625
      %v1075 = vmul.f32 %v1043, 0.0625
      %v1076 = vmul.f32 %v1044, 0.0625
      %v1077 = vmul.f32 %v1045, 0.0625
      %v1078 = vmul.f32 %v1046, 0.0625
      %v1079 = vmul.f32 %v1047, 0.0625
      %v1080 = vmul.f32 %v1048, 0.0625
      %v1081 = vmul.f32 %v1049, 0.0625
      %v1082 = vmul.f32 %v1050, 0.0625
      %v1083 = vmul.f32 %v1051, 0.0625
      %v1084 = vmul.f32 %v1052, 0.0625
      %v1085 = vmul.f32 %v1053, 0.0625
      %v1086 = vmul.f32 %v1054, 0.0625
      %v1087 = vmul.f32 %v1055, 0.0625
      %v1088 = vmul.f32 %v1056, 0.0625
      %v1089 = vmul.f32 %v1057, 0.0625
      %v1090 = vmul.f32 %v1058, 0.0625
      %v1091 = vmul.f32 %v1059, 0.0625
      %v1092 = vmul.f32 %v1060, 0.0625
      %v1093 = vmul.f32 %v1061, 0.0625
      %v1094 = vmul.f32 %v1062, 0.0625
      %v1095 = vmul.f32 %v1063, 0.0625
      %v1096 = vmul.f32 %v1064, 0.0625
      %v1097 = vmul.f32 %v1065, 0.0625
      %v1098 = vmul.f32 %v1066, 0.0625
      %v1099 = vmul.f32 %v1067, 0.0625
      %v1100 = vmul.f32 %v1068, 0.0625
      %v1101 = vmul.f32 %v1069, 0.0625
      %v1102 = vmul.f32 %v1070, 0.0625
      %v1103 = vmul.f32 %v1071, 0.0625
      %v1104 = vmul.f32 %v1072, 0.0625
      %v1105 = vmul.f32 %v1073, 0.0625
      %v1106 = vfloor.f32 %v1074
      %v1107 = vfloor.f32 %v1075
      %v1108 = vfloor.f32 %v1076
      %v1109 = vfloor.f32 %v1077
      %v1110 = vfloor.f32 %v1078
      %v1111 = vfloor.f32 %v1079
      %v1112 = vfloor.f32 %v1080
      %v1113 = vfloor.f32 %v1081
      %v1114 = vfloor.f32 %v1082
      %v1115 = vfloor.f32 %v1083
      %v1116 = vfloor.f32 %v1084
      %v1117 = vfloor.f32 %v1085
      %v1118 = vfloor.f32 %v1086
      %v1119 = vfloor.f32 %v1087
      %v1120 = vfloor.f32 %v1088
      %v1121 = vfloor.f32 %v1089
      %v1122 = vfloor.f32 %v1090
      %v1123 = vfloor.f32 %v1091
      %v1124 = vfloor.f32 %v1092
      %v1125 = vfloor.f32 %v1093
      %v1126 = vfloor.f32 %v1094
      %v1127 = vfloor.f32 %v1095
      %v1128 = vfloor.f32 %v1096
      %v1129 = vfloor.f32 %v1097
      %v1130 = vfloor.f32 %v1098
      %v1131 = vfloor.f32 %v1099
      %v1132 = vfloor.f32 %v1100
      %v1133 = vfloor.f32 %v1101
      %v1134 = vfloor.f32 %v1102
      %v1135 = vfloor.f32 %v1103
      %v1136 = vfloor.f32 %v1104
      %v1137 = vfloor.f32 %v1105
      %v1138 = vmul.f32 %v1106, 16.0
      %v1139 = vmul.f32 %v1107, 16.0
      %v1140 = vmul.f32 %v1108, 16.0
      %v1141 = vmul.f32 %v1109, 16.0
      %v1142 = vmul.f32 %v1110, 16.0
      %v1143 = vmul.f32 %v1111, 16.0
      %v1144 = vmul.f32 %v1112, 16.0
      %v1145 = vmul.f32 %v1113, 16.0
      %v1146 = vmul.f32 %v1114, 16.0
      %v1147 = vmul.f32 %v1115, 16.0
      %v1148 = vmul.f32 %v1116, 16.0
      %v1149 = vmul.f32 %v1117, 16.0
      %v1150 = vmul.f32 %v1118, 16.0
      %v1151 = vmul.f32 %v1119, 16.0
      %v1152 = vmul.f32 %v1120, 16.0
      %v1153 = vmul.f32 %v1121, 16.0
      %v1154 = vmul.f32 %v1122, 16.0
      %v1155 = vmul.f32 %v1123, 16.0
      %v1156 = vmul.f32 %v1124, 16.0
      %v1157 = vmul.f32 %v1125, 16.0
      %v1158 = vmul.f32 %v1126, 16.0
      %v1159 = vmul.f32 %v1127, 16.0
      %v1160 = vmul.f32 %v1128, 16.0
      %v1161 = vmul.f32 %v1129, 16.0
      %v1162 = vmul.f32 %v1130, 16.0
      %v1163 = vmul.f32 %v1131, 16.0
      %v1164 = vmul.f32 %v1132, 16.0
      %v1165 = vmul.f32 %v1133, 16.0
      %v1166 = vmul.f32 %v1134, 16.0
      %v1167 = vmul.f32 %v1135, 16.0
      %v1168 = vmul.f32 %v1136, 16.0
      %v1169 = vmul.f32 %v1137, 16.0
      %v1170 = vsub.f32 %v1010, %v1138
      %v1171 = vsub.f32 %v1011, %v1139
      %v1172 = vsub.f32 %v1012, %v1140
      %v1173 = vsub.f32 %v1013, %v1141
      %v1174 = vsub.f32 %v1014, %v1142
      %v1175 = vsub.f32 %v1015, %v1143
      %v1176 = vsub.f32 %v1016, %v1144
      %v1177 = vsub.f32 %v1017, %v1145
      %v1178 = vsub.f32 %v1018, %v1146
      %v1179 = vsub.f32 %v1019, %v1147
      %v1180 = vsub.f32 %v1020, %v1148
      %v1181 = vsub.f32 %v1021, %v1149
      %v1182 = vsub.f32 %v1022, %v1150
      %v1183 = vsub.f32 %v1023, %v1151
      %v1184 = vsub.f32 %v1024, %v1152
      %v1185 = vsub.f32 %v1025, %v1153
      %v1186 = vsub.f32 %v1026, %v1154
      %v1187 = vsub.f32 %v1027, %v1155
      %v1188 = vsub.f32 %v1028, %v1156
      %v1189 = vsub.f32 %v1029, %v1157
      %v1190 = vsub.f32 %v1030, %v1158
      %v1191 = vsub.f32 %v1031, %v1159
      %v1192 = vsub.f32 %v1032, %v1160
      %v1193 = vsub.f32 %v1033, %v1161
      %v1194 = vsub.f32 %v1034, %v1162
      %v1195 = vsub.f32 %v1035, %v1163
      %v1196 = vsub.f32 %v1036, %v1164
      %v1197 = vsub.f32 %v1037, %v1165
      %v1198 = vsub.f32 %v1038, %v1166
      %v1199 = vsub.f32 %v1039, %v1167
      %v1200 = vsub.f32 %v1040, %v1168
      %v1201 = vsub.f32 %v1041, %v1169
      %v1202 = vlaneseq
      %v1203 = vand.u32 %v1202, 127
      %p1204 = scmp.eq.s32.totalorder %s23, 1
      %s1205 = scalar_select %p1204, 128.0, 80.0
      %s1206 = scalar_select %p1204, 240.0, 104.0
      %p1207 = scmp.eq.s32.totalorder %s23, 2
      %s1208 = scalar_select %p1207, 264.0, %s1205
      %s1209 = scalar_select %p1207, 184.0, %s1206
      %v1210 = vmul.f32 %v911, 2.0
      %v1211 = vmul.f32 %v912, 2.0
      %v1212 = vmul.f32 %v913, 2.0
      %v1213 = vmul.f32 %v914, 2.0
      %v1214 = vmul.f32 %v915, 2.0
      %v1215 = vmul.f32 %v916, 2.0
      %v1216 = vmul.f32 %v917, 2.0
      %v1217 = vmul.f32 %v918, 2.0
      %v1218 = vmul.f32 %v919, 2.0
      %v1219 = vmul.f32 %v920, 2.0
      %v1220 = vmul.f32 %v921, 2.0
      %v1221 = vmul.f32 %v922, 2.0
      %v1222 = vmul.f32 %v923, 2.0
      %v1223 = vmul.f32 %v924, 2.0
      %v1224 = vmul.f32 %v925, 2.0
      %v1225 = vmul.f32 %v926, 2.0
      %v1226 = vmul.f32 %v927, 2.0
      %v1227 = vmul.f32 %v928, 2.0
      %v1228 = vmul.f32 %v929, 2.0
      %v1229 = vmul.f32 %v930, 2.0
      %v1230 = vmul.f32 %v931, 2.0
      %v1231 = vmul.f32 %v932, 2.0
      %v1232 = vmul.f32 %v933, 2.0
      %v1233 = vmul.f32 %v934, 2.0
      %v1234 = vmul.f32 %v935, 2.0
      %v1235 = vmul.f32 %v936, 2.0
      %v1236 = vmul.f32 %v937, 2.0
      %v1237 = vmul.f32 %v938, 2.0
      %v1238 = vmul.f32 %v939, 2.0
      %v1239 = vmul.f32 %v940, 2.0
      %v1240 = vmul.f32 %v941, 2.0
      %v1241 = vmul.f32 %v942, 2.0
      %v1242 = vsub.f32 %v1210, 0.5
      %v1243 = vsub.f32 %v1211, 0.5
      %v1244 = vsub.f32 %v1212, 0.5
      %v1245 = vsub.f32 %v1213, 0.5
      %v1246 = vsub.f32 %v1214, 0.5
      %v1247 = vsub.f32 %v1215, 0.5
      %v1248 = vsub.f32 %v1216, 0.5
      %v1249 = vsub.f32 %v1217, 0.5
      %v1250 = vsub.f32 %v1218, 0.5
      %v1251 = vsub.f32 %v1219, 0.5
      %v1252 = vsub.f32 %v1220, 0.5
      %v1253 = vsub.f32 %v1221, 0.5
      %v1254 = vsub.f32 %v1222, 0.5
      %v1255 = vsub.f32 %v1223, 0.5
      %v1256 = vsub.f32 %v1224, 0.5
      %v1257 = vsub.f32 %v1225, 0.5
      %v1258 = vsub.f32 %v1226, 0.5
      %v1259 = vsub.f32 %v1227, 0.5
      %v1260 = vsub.f32 %v1228, 0.5
      %v1261 = vsub.f32 %v1229, 0.5
      %v1262 = vsub.f32 %v1230, 0.5
      %v1263 = vsub.f32 %v1231, 0.5
      %v1264 = vsub.f32 %v1232, 0.5
      %v1265 = vsub.f32 %v1233, 0.5
      %v1266 = vsub.f32 %v1234, 0.5
      %v1267 = vsub.f32 %v1235, 0.5
      %v1268 = vsub.f32 %v1236, 0.5
      %v1269 = vsub.f32 %v1237, 0.5
      %v1270 = vsub.f32 %v1238, 0.5
      %v1271 = vsub.f32 %v1239, 0.5
      %v1272 = vsub.f32 %v1240, 0.5
      %v1273 = vsub.f32 %v1241, 0.5
      %vm1274 = vcmp.eq.s32.totalorder %v1203, 0
      %v1275 = vsel %vm1274, %v1170, %v1106
      %v1276 = vsel %vm1274, %v1171, %v1107
      %v1277 = vsel %vm1274, %v1172, %v1108
      %v1278 = vsel %vm1274, %v1173, %v1109
      %v1279 = vsel %vm1274, %v1174, %v1110
      %v1280 = vsel %vm1274, %v1175, %v1111
      %v1281 = vsel %vm1274, %v1176, %v1112
      %v1282 = vsel %vm1274, %v1177, %v1113
      %v1283 = vsel %vm1274, %v1178, %v1114
      %v1284 = vsel %vm1274, %v1179, %v1115
      %v1285 = vsel %vm1274, %v1180, %v1116
      %v1286 = vsel %vm1274, %v1181, %v1117
      %v1287 = vsel %vm1274, %v1182, %v1118
      %v1288 = vsel %vm1274, %v1183, %v1119
      %v1289 = vsel %vm1274, %v1184, %v1120
      %v1290 = vsel %vm1274, %v1185, %v1121
      %v1291 = vsel %vm1274, %v1186, %v1122
      %v1292 = vsel %vm1274, %v1187, %v1123
      %v1293 = vsel %vm1274, %v1188, %v1124
      %v1294 = vsel %vm1274, %v1189, %v1125
      %v1295 = vsel %vm1274, %v1190, %v1126
      %v1296 = vsel %vm1274, %v1191, %v1127
      %v1297 = vsel %vm1274, %v1192, %v1128
      %v1298 = vsel %vm1274, %v1193, %v1129
      %v1299 = vsel %vm1274, %v1194, %v1130
      %v1300 = vsel %vm1274, %v1195, %v1131
      %v1301 = vsel %vm1274, %v1196, %v1132
      %v1302 = vsel %vm1274, %v1197, %v1133
      %v1303 = vsel %vm1274, %v1198, %v1134
      %v1304 = vsel %vm1274, %v1199, %v1135
      %v1305 = vsel %vm1274, %v1200, %v1136
      %v1306 = vsel %vm1274, %v1201, %v1137
      %v1307 = vadd.f32 %v1242, %v1275
      %v1308 = vadd.f32 %v1243, %v1276
      %v1309 = vadd.f32 %v1244, %v1277
      %v1310 = vadd.f32 %v1245, %v1278
      %v1311 = vadd.f32 %v1246, %v1279
      %v1312 = vadd.f32 %v1247, %v1280
      %v1313 = vadd.f32 %v1248, %v1281
      %v1314 = vadd.f32 %v1249, %v1282
      %v1315 = vadd.f32 %v1250, %v1283
      %v1316 = vadd.f32 %v1251, %v1284
      %v1317 = vadd.f32 %v1252, %v1285
      %v1318 = vadd.f32 %v1253, %v1286
      %v1319 = vadd.f32 %v1254, %v1287
      %v1320 = vadd.f32 %v1255, %v1288
      %v1321 = vadd.f32 %v1256, %v1289
      %v1322 = vadd.f32 %v1257, %v1290
      %v1323 = vadd.f32 %v1258, %v1291
      %v1324 = vadd.f32 %v1259, %v1292
      %v1325 = vadd.f32 %v1260, %v1293
      %v1326 = vadd.f32 %v1261, %v1294
      %v1327 = vadd.f32 %v1262, %v1295
      %v1328 = vadd.f32 %v1263, %v1296
      %v1329 = vadd.f32 %v1264, %v1297
      %v1330 = vadd.f32 %v1265, %v1298
      %v1331 = vadd.f32 %v1266, %v1299
      %v1332 = vadd.f32 %v1267, %v1300
      %v1333 = vadd.f32 %v1268, %v1301
      %v1334 = vadd.f32 %v1269, %v1302
      %v1335 = vadd.f32 %v1270, %v1303
      %v1336 = vadd.f32 %v1271, %v1304
      %v1337 = vadd.f32 %v1272, %v1305
      %v1338 = vadd.f32 %v1273, %v1306
      %v1339 = vmul.f32 %v1307, 8.0
      %v1340 = vmul.f32 %v1308, 8.0
      %v1341 = vmul.f32 %v1309, 8.0
      %v1342 = vmul.f32 %v1310, 8.0
      %v1343 = vmul.f32 %v1311, 8.0
      %v1344 = vmul.f32 %v1312, 8.0
      %v1345 = vmul.f32 %v1313, 8.0
      %v1346 = vmul.f32 %v1314, 8.0
      %v1347 = vmul.f32 %v1315, 8.0
      %v1348 = vmul.f32 %v1316, 8.0
      %v1349 = vmul.f32 %v1317, 8.0
      %v1350 = vmul.f32 %v1318, 8.0
      %v1351 = vmul.f32 %v1319, 8.0
      %v1352 = vmul.f32 %v1320, 8.0
      %v1353 = vmul.f32 %v1321, 8.0
      %v1354 = vmul.f32 %v1322, 8.0
      %v1355 = vmul.f32 %v1323, 8.0
      %v1356 = vmul.f32 %v1324, 8.0
      %v1357 = vmul.f32 %v1325, 8.0
      %v1358 = vmul.f32 %v1326, 8.0
      %v1359 = vmul.f32 %v1327, 8.0
      %v1360 = vmul.f32 %v1328, 8.0
      %v1361 = vmul.f32 %v1329, 8.0
      %v1362 = vmul.f32 %v1330, 8.0
      %v1363 = vmul.f32 %v1331, 8.0
      %v1364 = vmul.f32 %v1332, 8.0
      %v1365 = vmul.f32 %v1333, 8.0
      %v1366 = vmul.f32 %v1334, 8.0
      %v1367 = vmul.f32 %v1335, 8.0
      %v1368 = vmul.f32 %v1336, 8.0
      %v1369 = vmul.f32 %v1337, 8.0
      %v1370 = vmul.f32 %v1338, 8.0
      %v1371 = vmul.f32 %v1210, %v1210
      %v1372 = vmul.f32 %v1211, %v1211
      %v1373 = vmul.f32 %v1212, %v1212
      %v1374 = vmul.f32 %v1213, %v1213
      %v1375 = vmul.f32 %v1214, %v1214
      %v1376 = vmul.f32 %v1215, %v1215
      %v1377 = vmul.f32 %v1216, %v1216
      %v1378 = vmul.f32 %v1217, %v1217
      %v1379 = vmul.f32 %v1218, %v1218
      %v1380 = vmul.f32 %v1219, %v1219
      %v1381 = vmul.f32 %v1220, %v1220
      %v1382 = vmul.f32 %v1221, %v1221
      %v1383 = vmul.f32 %v1222, %v1222
      %v1384 = vmul.f32 %v1223, %v1223
      %v1385 = vmul.f32 %v1224, %v1224
      %v1386 = vmul.f32 %v1225, %v1225
      %v1387 = vmul.f32 %v1226, %v1226
      %v1388 = vmul.f32 %v1227, %v1227
      %v1389 = vmul.f32 %v1228, %v1228
      %v1390 = vmul.f32 %v1229, %v1229
      %v1391 = vmul.f32 %v1230, %v1230
      %v1392 = vmul.f32 %v1231, %v1231
      %v1393 = vmul.f32 %v1232, %v1232
      %v1394 = vmul.f32 %v1233, %v1233
      %v1395 = vmul.f32 %v1234, %v1234
      %v1396 = vmul.f32 %v1235, %v1235
      %v1397 = vmul.f32 %v1236, %v1236
      %v1398 = vmul.f32 %v1237, %v1237
      %v1399 = vmul.f32 %v1238, %v1238
      %v1400 = vmul.f32 %v1239, %v1239
      %v1401 = vmul.f32 %v1240, %v1240
      %v1402 = vmul.f32 %v1241, %v1241
      %vm1403 = vcmp.eq.s32.totalorder %v1203, 2
      %v1404 = vstv %s1208
      %v1405 = vstv %s1209
      %v1406 = vsel %vm1403, %v1404, %v1405
      %v1407 = vmul.f32 %v1371, %v1406
      %v1408 = vmul.f32 %v1372, %v1406
      %v1409 = vmul.f32 %v1373, %v1406
      %v1410 = vmul.f32 %v1374, %v1406
      %v1411 = vmul.f32 %v1375, %v1406
      %v1412 = vmul.f32 %v1376, %v1406
      %v1413 = vmul.f32 %v1377, %v1406
      %v1414 = vmul.f32 %v1378, %v1406
      %v1415 = vmul.f32 %v1379, %v1406
      %v1416 = vmul.f32 %v1380, %v1406
      %v1417 = vmul.f32 %v1381, %v1406
      %v1418 = vmul.f32 %v1382, %v1406
      %v1419 = vmul.f32 %v1383, %v1406
      %v1420 = vmul.f32 %v1384, %v1406
      %v1421 = vmul.f32 %v1385, %v1406
      %v1422 = vmul.f32 %v1386, %v1406
      %v1423 = vmul.f32 %v1387, %v1406
      %v1424 = vmul.f32 %v1388, %v1406
      %v1425 = vmul.f32 %v1389, %v1406
      %v1426 = vmul.f32 %v1390, %v1406
      %v1427 = vmul.f32 %v1391, %v1406
      %v1428 = vmul.f32 %v1392, %v1406
      %v1429 = vmul.f32 %v1393, %v1406
      %v1430 = vmul.f32 %v1394, %v1406
      %v1431 = vmul.f32 %v1395, %v1406
      %v1432 = vmul.f32 %v1396, %v1406
      %v1433 = vmul.f32 %v1397, %v1406
      %v1434 = vmul.f32 %v1398, %v1406
      %v1435 = vmul.f32 %v1399, %v1406
      %v1436 = vmul.f32 %v1400, %v1406
      %v1437 = vmul.f32 %v1401, %v1406
      %v1438 = vmul.f32 %v1402, %v1406
      %vm1439 = vcmp.lt.s32.totalorder %v1203, 2
      %vm1440 = vcmp.lt.s32.totalorder %v1203, 4
      %v1441 = vsel %vm1440, %v1407, %v911
      %v1442 = vsel %vm1440, %v1408, %v912
      %v1443 = vsel %vm1440, %v1409, %v913
      %v1444 = vsel %vm1440, %v1410, %v914
      %v1445 = vsel %vm1440, %v1411, %v915
      %v1446 = vsel %vm1440, %v1412, %v916
      %v1447 = vsel %vm1440, %v1413, %v917
      %v1448 = vsel %vm1440, %v1414, %v918
      %v1449 = vsel %vm1440, %v1415, %v919
      %v1450 = vsel %vm1440, %v1416, %v920
      %v1451 = vsel %vm1440, %v1417, %v921
      %v1452 = vsel %vm1440, %v1418, %v922
      %v1453 = vsel %vm1440, %v1419, %v923
      %v1454 = vsel %vm1440, %v1420, %v924
      %v1455 = vsel %vm1440, %v1421, %v925
      %v1456 = vsel %vm1440, %v1422, %v926
      %v1457 = vsel %vm1440, %v1423, %v927
      %v1458 = vsel %vm1440, %v1424, %v928
      %v1459 = vsel %vm1440, %v1425, %v929
      %v1460 = vsel %vm1440, %v1426, %v930
      %v1461 = vsel %vm1440, %v1427, %v931
      %v1462 = vsel %vm1440, %v1428, %v932
      %v1463 = vsel %vm1440, %v1429, %v933
      %v1464 = vsel %vm1440, %v1430, %v934
      %v1465 = vsel %vm1440, %v1431, %v935
      %v1466 = vsel %vm1440, %v1432, %v936
      %v1467 = vsel %vm1440, %v1433, %v937
      %v1468 = vsel %vm1440, %v1434, %v938
      %v1469 = vsel %vm1440, %v1435, %v939
      %v1470 = vsel %vm1440, %v1436, %v940
      %v1471 = vsel %vm1440, %v1437, %v941
      %v1472 = vsel %vm1440, %v1438, %v942
      %v1473 = vsel %vm1439, %v1339, %v1441
      %v1474 = vsel %vm1439, %v1340, %v1442
      %v1475 = vsel %vm1439, %v1341, %v1443
      %v1476 = vsel %vm1439, %v1342, %v1444
      %v1477 = vsel %vm1439, %v1343, %v1445
      %v1478 = vsel %vm1439, %v1344, %v1446
      %v1479 = vsel %vm1439, %v1345, %v1447
      %v1480 = vsel %vm1439, %v1346, %v1448
      %v1481 = vsel %vm1439, %v1347, %v1449
      %v1482 = vsel %vm1439, %v1348, %v1450
      %v1483 = vsel %vm1439, %v1349, %v1451
      %v1484 = vsel %vm1439, %v1350, %v1452
      %v1485 = vsel %vm1439, %v1351, %v1453
      %v1486 = vsel %vm1439, %v1352, %v1454
      %v1487 = vsel %vm1439, %v1353, %v1455
      %v1488 = vsel %vm1439, %v1354, %v1456
      %v1489 = vsel %vm1439, %v1355, %v1457
      %v1490 = vsel %vm1439, %v1356, %v1458
      %v1491 = vsel %vm1439, %v1357, %v1459
      %v1492 = vsel %vm1439, %v1358, %v1460
      %v1493 = vsel %vm1439, %v1359, %v1461
      %v1494 = vsel %vm1439, %v1360, %v1462
      %v1495 = vsel %vm1439, %v1361, %v1463
      %v1496 = vsel %vm1439, %v1362, %v1464
      %v1497 = vsel %vm1439, %v1363, %v1465
      %v1498 = vsel %vm1439, %v1364, %v1466
      %v1499 = vsel %vm1439, %v1365, %v1467
      %v1500 = vsel %vm1439, %v1366, %v1468
      %v1501 = vsel %vm1439, %v1367, %v1469
      %v1502 = vsel %vm1439, %v1368, %v1470
      %v1503 = vsel %vm1439, %v1369, %v1471
      %v1504 = vsel %vm1439, %v1370, %v1472
      %vm1505 = vcmask 203776
      %1506 = vst.msk [vmem:[%s317] sm:$0xff] %vm1505, %v1473
      %1507 = vst.msk [vmem:[%s317 + $0x8] sm:$0xff] %vm1505, %v1474
      %1508 = vst.msk [vmem:[%s317 + $0x10] sm:$0xff] %vm1505, %v1475
      %1509 = vst.msk [vmem:[%s317 + $0x18] sm:$0xff] %vm1505, %v1476
      %1510 = vst.msk [vmem:[%s317 + $0x20] sm:$0xff] %vm1505, %v1477
      %1511 = vst.msk [vmem:[%s317 + $0x28] sm:$0xff] %vm1505, %v1478
      %1512 = vst.msk [vmem:[%s317 + $0x30] sm:$0xff] %vm1505, %v1479
      %1513 = vst.msk [vmem:[%s317 + $0x38] sm:$0xff] %vm1505, %v1480
      %1514 = vst.msk [vmem:[%s317 + $0x40] sm:$0xff] %vm1505, %v1481
      %1515 = vst.msk [vmem:[%s317 + $0x48] sm:$0xff] %vm1505, %v1482
      %1516 = vst.msk [vmem:[%s317 + $0x50] sm:$0xff] %vm1505, %v1483
      %1517 = vst.msk [vmem:[%s317 + $0x58] sm:$0xff] %vm1505, %v1484
      %1518 = vst.msk [vmem:[%s317 + $0x60] sm:$0xff] %vm1505, %v1485
      %1519 = vst.msk [vmem:[%s317 + $0x68] sm:$0xff] %vm1505, %v1486
      %1520 = vst.msk [vmem:[%s317 + $0x70] sm:$0xff] %vm1505, %v1487
      %1521 = vst.msk [vmem:[%s317 + $0x78] sm:$0xff] %vm1505, %v1488
      %1522 = vst.msk [vmem:[%s317 + $0x80] sm:$0xff] %vm1505, %v1489
      %1523 = vst.msk [vmem:[%s317 + $0x88] sm:$0xff] %vm1505, %v1490
      %1524 = vst.msk [vmem:[%s317 + $0x90] sm:$0xff] %vm1505, %v1491
      %1525 = vst.msk [vmem:[%s317 + $0x98] sm:$0xff] %vm1505, %v1492
      %1526 = vst.msk [vmem:[%s317 + $0xa0] sm:$0xff] %vm1505, %v1493
      %1527 = vst.msk [vmem:[%s317 + $0xa8] sm:$0xff] %vm1505, %v1494
      %1528 = vst.msk [vmem:[%s317 + $0xb0] sm:$0xff] %vm1505, %v1495
      %1529 = vst.msk [vmem:[%s317 + $0xb8] sm:$0xff] %vm1505, %v1496
      %1530 = vst.msk [vmem:[%s317 + $0xc0] sm:$0xff] %vm1505, %v1497
      %1531 = vst.msk [vmem:[%s317 + $0xc8] sm:$0xff] %vm1505, %v1498
      %1532 = vst.msk [vmem:[%s317 + $0xd0] sm:$0xff] %vm1505, %v1499
      %1533 = vst.msk [vmem:[%s317 + $0xd8] sm:$0xff] %vm1505, %v1500
      %1534 = vst.msk [vmem:[%s317 + $0xe0] sm:$0xff] %vm1505, %v1501
      %1535 = vst.msk [vmem:[%s317 + $0xe8] sm:$0xff] %vm1505, %v1502
      %1536 = vst.msk [vmem:[%s317 + $0xf0] sm:$0xff] %vm1505, %v1503
      %1537 = vst.msk [vmem:[%s317 + $0xf8] sm:$0xff] %vm1505, %v1504
      %s1538 = smul.u32 32, %s22
      %p1539 = scmp.lt.s32.totalorder %s21, 1
      %s1540 = scalar_select %p1539, %s21, 1
      %p1541 = scmp.lt.s32.totalorder %s23, 2
      %s1542 = scalar_select %p1541, %s23, 2
      %p1543 = scmp.lt.s32.totalorder %s1538, 31
      %s1544 = scalar_select %p1543, %s1538, 31
      %s1545 = smul.addr %s1542, 32
      %s1546 = sadd.s32 %s1544, %s1545
      %s1547 = smul.addr %s1540, 96
      %s1548 = sadd.s32 %s1546, %s1547
      %s1549 = smul.addr %s1548, 4
      %s1550 = scalar_lea.vmem %s3, %s1549
      %s1551 = smul.u32 32, %s22
      %p1552 = scmp.lt.s32.totalorder %s21, 1
      %s1553 = scalar_select %p1552, %s21, 1
      %p1554 = scmp.lt.s32.totalorder %s23, 2
      %s1555 = scalar_select %p1554, %s23, 2
      %p1556 = scmp.lt.s32.totalorder %s1551, 31
      %s1557 = scalar_select %p1556, %s1551, 31
      %s1558 = smul.addr %s1555, 32
      %s1559 = sadd.s32 %s1557, %s1558
      %s1560 = smul.addr %s1553, 96
      %s1561 = sadd.s32 %s1559, %s1560
      %s1562 = smul.addr %s1561, 8
      %s1563 = scalar_lea.vmem %s4, %s1562
      // Predicated region
      $region33: #{tpu_custom_call.1} parent=31 // pred_check
        %p1564 = pneg %p137
      $region34: #{tpu_custom_call.1} parent=31 // pred_check_branch
        %1566 = sbr.rel (%p1564) target = $region36
      $region35: #{tpu_custom_call.1} parent=31 // pred_region
        %s1567 = smul.u32 32, %s22
      $region36: #{tpu_custom_call.1} parent=31 // pred_fallthru
        _
      // Predicated region
      $region37: #{tpu_custom_call.1} parent=31 // pred_check
        %p1568 = pneg %p167
      $region38: #{tpu_custom_call.1} parent=31 // pred_check_branch
        %1570 = sbr.rel (%p1568) target = $region40
      $region39: #{tpu_custom_call.1} parent=31 // pred_region
        %s1571 = smul.u32 32, %s22
      $region40: #{tpu_custom_call.1} parent=31 // pred_fallthru
        _
    $region32: #{tpu_custom_call.1} parent=5 // pred_fallthru
      _
    %p1572 = scmp.le.s32.totalorder 2, %s11
    // Predicated region
    $region41: #{tpu_custom_call.1} parent=5 // pred_check
      %p1573 = pneg %p1572
    $region42: #{tpu_custom_call.1} parent=5 // pred_check_branch
      %1575 = sbr.rel (%p1573) target = $region44
    $region43: #{tpu_custom_call.1} parent=5 // pred_region
      %s1576 = ssub.s32 %s11, 2
      // Predicated region
      $region45: #{tpu_custom_call.1} parent=43 // pred_check
        %p1577 = pneg %p143
      $region46: #{tpu_custom_call.1} parent=43 // pred_check_branch
        %1579 = sbr.rel (%p1577) target = $region48
      $region47: #{tpu_custom_call.1} parent=43 // pred_region
        %s1580 = smul.u32 32, %s25
        %p1581 = scmp.lt.s32.totalorder %s24, 1
        %s1582 = scalar_select %p1581, %s24, 1
        %p1583 = scmp.lt.s32.totalorder %s26, 2
        %s1584 = scalar_select %p1583, %s26, 2
        %p1585 = scmp.lt.s32.totalorder %s1580, 31
        %s1586 = scalar_select %p1585, %s1580, 31
        %s1587 = smul.addr %s1584, 32
        %s1588 = sadd.s32 %s1586, %s1587
        %s1589 = smul.addr %s1582, 96
        %s1590 = sadd.s32 %s1588, %s1589
        %s1591 = smul.addr %s1590, 4
        %s1592 = scalar_lea.vmem %s3, %s1591
      $region48: #{tpu_custom_call.1} parent=43 // pred_fallthru
        _
      // Predicated region
      $region49: #{tpu_custom_call.1} parent=43 // pred_check
        %p1593 = pneg %p173
      $region50: #{tpu_custom_call.1} parent=43 // pred_check_branch
        %1595 = sbr.rel (%p1593) target = $region52
      $region51: #{tpu_custom_call.1} parent=43 // pred_region
        %s1596 = smul.u32 32, %s25
        %p1597 = scmp.lt.s32.totalorder %s24, 1
        %s1598 = scalar_select %p1597, %s24, 1
        %p1599 = scmp.lt.s32.totalorder %s26, 2
        %s1600 = scalar_select %p1599, %s26, 2
        %p1601 = scmp.lt.s32.totalorder %s1596, 31
        %s1602 = scalar_select %p1601, %s1596, 31
        %s1603 = smul.addr %s1600, 32
        %s1604 = sadd.s32 %s1602, %s1603
        %s1605 = smul.addr %s1598, 96
        %s1606 = sadd.s32 %s1604, %s1605
        %s1607 = smul.addr %s1606, 8
        %s1608 = scalar_lea.vmem %s4, %s1607
      $region52: #{tpu_custom_call.1} parent=43 // pred_fallthru
        _
    $region44: #{tpu_custom_call.1} parent=5 // pred_fallthru
      _
  $region6: #{tpu_custom_call.1} parent=0 // loop_footer
    %s15 = sadd.s32 1, %s11
  $region7: #{tpu_custom_call.1} parent=0 // loop_footer_branch
    %10 = sbr.rel target = $region3
  $region8: #{tpu_custom_call.1} parent=0 // loop_exit
    _

</llo_original>
